<compile_context>
chip_gen: v5e
topology: v5e:2x2
jax: 0.10.0
libtpu: 0.0.40
codegen_flags: <defaults>
</compile_context>

<pallas_src>
import collections
import functools

import jax
import jax.numpy as jnp
from jax.experimental import pallas as pl
from jax.experimental.pallas import tpu as pltpu


def _round_up(v, m):
    return (v + m - 1) // m * m


LSTMParams = collections.namedtuple(
    "LSTMParams", ["wx", "wh", "b", "input_size", "hidden", "i_pad", "h_pad"])


def prepare_params(wx, wh, b, *, param_dtype=jnp.bfloat16):
    """One-time prep: fold sigmoid 0.5 pre-scale, pad/relayout gate columns, cast.

    wx: (I, 4H), wh: (H, 4H), b: (1, 4H); gate column order [f | i | o | g].
    """
    I, four_h = wx.shape
    H = four_h // 4
    I_pad = _round_up(I, 128)
    H_pad = _round_up(H, 128)

    # Fold the 0.5 sigmoid input scale into the f/i/o gate columns (exact: power of 2).
    scale = jnp.concatenate([jnp.full((3 * H,), 0.5, jnp.float32),
                             jnp.ones((H,), jnp.float32)])
    wx = wx.astype(jnp.float32) * scale
    wh = wh.astype(jnp.float32) * scale
    b = b.astype(jnp.float32) * scale

    def pad_gate_cols(w, rows_pad):
        rows = w.shape[0]
        out = jnp.zeros((rows_pad, 4 * H_pad), jnp.float32)
        for k in range(4):
            out = out.at[:rows, k * H_pad:k * H_pad + H].set(w[:, k * H:(k + 1) * H])
        return out

    wx_p = pad_gate_cols(wx, I_pad).astype(param_dtype)
    wh_p = pad_gate_cols(wh, H_pad).astype(param_dtype)
    b_p = pad_gate_cols(b, 1)                       # bias stays f32
    return LSTMParams(wx_p, wh_p, b_p, I, H, I_pad, H_pad)


def _lstm_kernel(x_ref, wx_ref, wh_ref, b_ref,
                 hseq_ref, c_out_ref,
                 h_scr, c_scr, xg_scr,
                 *, t_chunk, batch, hidden, seq_len, mask_tail):
    chunk = pl.program_id(1)

    # h0 = c0 = 0 (matches h=None / c=None in the PyTorch module).
    @pl.when(chunk == 0)
    def _():
        h_scr[...] = jnp.zeros_like(h_scr)
        c_scr[...] = jnp.zeros_like(c_scr)

    # ---- Phase 1: hoisted input projection for the whole chunk, staged in VMEM.
    x2 = x_ref[...].reshape(t_chunk * batch, -1)                      # (T*B, I) bf16
    xg_scr[...] = (jnp.dot(x2, wx_ref[...],
                           preferred_element_type=jnp.float32)
                   + b_ref[...])                                      # (T*B, 4H) f32

    wh = wh_ref[...]
    H = hidden

    # ---- Phase 2: sequential recurrence over the chunk ----------------------
    def step(t, carry):
        h_prev, c_prev = carry
        row = pl.multiple_of(t * batch, batch)
        g_x = xg_scr[pl.ds(row, batch), :]                            # (B, 4H) f32
        gates = g_x + jnp.dot(h_prev.astype(wh.dtype), wh,
                              preferred_element_type=jnp.float32)
        # f/i/o columns are pre-scaled by 0.5 -> sigmoid(z) = 0.5*tanh(z/2)+0.5.
        f_t = 0.5 * jnp.tanh(gates[:, 0 * H:1 * H]) + 0.5
        i_t = 0.5 * jnp.tanh(gates[:, 1 * H:2 * H]) + 0.5
        o_t = 0.5 * jnp.tanh(gates[:, 2 * H:3 * H]) + 0.5
        g_t = jnp.tanh(gates[:, 3 * H:4 * H])
        c_new = f_t * c_prev + i_t * g_t
        h_new = o_t * jnp.tanh(c_new)
        if mask_tail:
            valid = (chunk * t_chunk + t) < seq_len
            c_new = jnp.where(valid, c_new, c_prev)
            h_new = jnp.where(valid, h_new, h_prev)
        # Lane-dense store into the resident VMEM output block.
        hseq_ref[t] = h_new.astype(hseq_ref.dtype)
        return h_new, c_new

    h_f, c_f = jax.lax.fori_loop(0, t_chunk, step, (h_scr[...], c_scr[...]),
                                 unroll=True)
    h_scr[...] = h_f
    c_scr[...] = c_f

    # Final c: explicit store on the last chunk only (final h comes from h_seq).
    @pl.when(chunk == pl.num_programs(1) - 1)
    def _():
        c_out_ref[0] = c_f.astype(c_out_ref.dtype)


def lstm_pallas(x, params: LSTMParams, *, t_chunk=16):
    """x: (S, B, I) f32; params from prepare_params()."""
    S, B, I = x.shape
    assert I == params.input_size
    H, H_pad, I_pad = params.hidden, params.h_pad, params.i_pad

    # ---- Padded / aligned shapes (zeros are exact; sliced off at the end).
    B_pad = _round_up(max(B, 16), 16)            # bf16 sublane-packed batch
    t_chunk = max(1, min(t_chunk, _round_up(S, 8)))
    S_pad = _round_up(S, t_chunk)                # no gcd cliff: pad + mask tail
    n_chunks = S_pad // t_chunk
    mask_tail = S_pad != S

    # Batch split across TensorCores (v7x megacore); harmless size-1 elsewhere.
    n_bsplit = 2 if (B_pad % 32 == 0) else 1
    B_core = B_pad // n_bsplit

    x = x.astype(jnp.bfloat16)
    if (S_pad, B_pad, I_pad) != (S, B, I):
        x_p = jnp.zeros((S_pad, B_pad, I_pad), jnp.bfloat16).at[:S, :B, :I].set(x)
    else:
        x_p = x

    kernel = functools.partial(_lstm_kernel, t_chunk=t_chunk, batch=B_core,
                               hidden=H_pad, seq_len=S, mask_tail=mask_tail)

    out_shape = (
        jax.ShapeDtypeStruct((S_pad, B_pad, H_pad), jnp.float32),    # h_seq
        jax.ShapeDtypeStruct((1, B_pad, H_pad), jnp.float32),        # final c
    )

    grid_spec = pltpu.PrefetchScalarGridSpec(
        num_scalar_prefetch=0,
        grid=(n_bsplit, n_chunks),
        in_specs=[
            pl.BlockSpec((t_chunk, B_core, I_pad), lambda cb, t: (t, cb, 0)),  # x chunk
            pl.BlockSpec((I_pad, 4 * H_pad), lambda cb, t: (0, 0),
                         pipeline_mode=pl.Buffered(1)),                        # Wx resident
            pl.BlockSpec((H_pad, 4 * H_pad), lambda cb, t: (0, 0),
                         pipeline_mode=pl.Buffered(1)),                        # Wh resident
            pl.BlockSpec((1, 4 * H_pad), lambda cb, t: (0, 0),
                         pipeline_mode=pl.Buffered(1)),                        # bias resident
        ],
        out_specs=[
            pl.BlockSpec((t_chunk, B_core, H_pad), lambda cb, t: (t, cb, 0)),  # h_seq chunk
            pl.BlockSpec((1, B_core, H_pad), lambda cb, t: (0, cb, 0)),        # final c
        ],
        scratch_shapes=[
            pltpu.VMEM((B_core, H_pad), jnp.float32),                 # h carry
            pltpu.VMEM((B_core, H_pad), jnp.float32),                 # c carry
            pltpu.VMEM((t_chunk * B_core, 4 * H_pad), jnp.float32),   # staged xg
        ],
    )

    # Explicit VMEM budget: single-buffered weights + double-buffered x/h_seq/c + scratch.
    bytes_needed = (
        params.wx.size * params.wx.dtype.itemsize
        + params.wh.size * params.wh.dtype.itemsize
        + params.b.size * 4
        + 2 * t_chunk * B_core * I_pad * 2
        + 2 * t_chunk * B_core * H_pad * 4
        + 2 * B_core * H_pad * 4
        + 2 * B_core * H_pad * 4
        + t_chunk * B_core * 4 * H_pad * 4
    )
    vmem_limit = int(min(max(bytes_needed * 3 // 2, 16 * 1024 * 1024),
                         60 * 1024 * 1024))

    h_seq_p, c_p = pl.pallas_call(
        kernel,
        out_shape=out_shape,
        grid_spec=grid_spec,
        compiler_params=pltpu.CompilerParams(
            dimension_semantics=("parallel", "arbitrary"),
            vmem_limit_bytes=vmem_limit),
    )(x_p, params.wx, params.wh, params.b)

    # Strip padding; final h is just the last row of h_seq.
    h_seq = h_seq_p[:S, :B, :H]
    h_fin = h_seq[S - 1:S]
    c_fin = c_p[:, :B, :H]
    return h_seq, h_fin, c_fin


def lstm_reference(x, wx, wh, b):
    """Pure-JAX f32 reference with identical semantics (for verification)."""
    S, B, I = x.shape
    H = wh.shape[0]

    def step(carry, x_t):
        h, c = carry
        gates = x_t @ wx + h @ wh + b
        f = jax.nn.sigmoid(gates[:, 0 * H:1 * H])
        i = jax.nn.sigmoid(gates[:, 1 * H:2 * H])
        o = jax.nn.sigmoid(gates[:, 2 * H:3 * H])
        g = jnp.tanh(gates[:, 3 * H:4 * H])
        c = f * c + i * g
        h = o * jnp.tanh(c)
        return (h, c), h

    h0 = jnp.zeros((B, H), jnp.float32)
    c0 = jnp.zeros((B, H), jnp.float32)
    (h_f, c_f), h_seq = jax.lax.scan(step, (h0, c0), x)
    return h_seq, h_f[None], c_f[None]


def init_params(key, input_size, hidden_size):
    """Deterministic init mimicking nn.Linear(U(-1/sqrt(fan_in), 1/sqrt(fan_in)))."""
    keys = jax.random.split(key, 16)
    k_in = 1.0 / jnp.sqrt(jnp.float32(input_size))
    k_h = 1.0 / jnp.sqrt(jnp.float32(hidden_size))

    def lin(kw, kb, fan_in, bound):
        w = jax.random.uniform(kw, (hidden_size, fan_in), jnp.float32, -bound, bound)
        bb = jax.random.uniform(kb, (hidden_size,), jnp.float32, -bound, bound)
        return w, bb

    # gate order: f, i, o, g(c)
    in_ws, in_bs, st_ws, st_bs = [], [], [], []
    for g in range(4):
        w, bb = lin(keys[2 * g], keys[2 * g + 1], input_size, k_in)
        in_ws.append(w); in_bs.append(bb)
        w, bb = lin(keys[8 + 2 * g], keys[9 + 2 * g], hidden_size, k_h)
        st_ws.append(w); st_bs.append(bb)

    # Pre-transpose & concatenate: (I, 4H), (H, 4H), (1, 4H)
    wx = jnp.concatenate([w.T for w in in_ws], axis=1)
    wh = jnp.concatenate([w.T for w in st_ws], axis=1)
    b = jnp.concatenate([bi + bs for bi, bs in zip(in_bs, st_bs)], axis=0)[None, :]
    return wx, wh, b


if __name__ == "__main__":
    seq_len, batch, input_size, hidden_size = 8, 2, 32, 32

    key = jax.random.PRNGKey(0)
    kx, kp = jax.random.split(key)
    x = jax.random.normal(kx, (seq_len, batch, input_size), jnp.float32)
    wx, wh, b = init_params(kp, input_size, hidden_size)

    # One-time parameter preparation (pad / relayout / fold 0.5 / cast to bf16).
    params = prepare_params(wx, wh, b)

    h_seq, h_fin, c_fin = jax.block_until_ready(lstm_pallas(x, params))
    h_seq_ref, h_ref, c_ref = lstm_reference(x, wx, wh, b)

    assert h_seq.shape == (seq_len, batch, hidden_size)
    assert h_fin.shape == (1, batch, hidden_size)
    assert c_fin.shape == (1, batch, hidden_size)
    # bf16 weights/activations (f32 accumulation) -> looser tolerance than pure f32.
    assert jnp.allclose(h_seq, h_seq_ref, atol=2e-2, rtol=2e-2)
    assert jnp.allclose(h_fin, h_ref, atol=2e-2, rtol=2e-2)
    assert jnp.allclose(c_fin, c_ref, atol=2e-2, rtol=2e-2)

    print("KERNEL_OK")
</pallas_src>

<mosaic_0001>
module attributes {stable_mosaic.version = 11 : i64} {
  func.func @_lstm_kernel(%arg0: i32, %arg1: i32, %arg2: memref<8x16x128xbf16, #tpu.memory_space<vmem>>, %arg3: memref<128x512xbf16, #tpu.memory_space<vmem>>, %arg4: memref<128x512xbf16, #tpu.memory_space<vmem>>, %arg5: memref<1x512xf32, #tpu.memory_space<vmem>>, %arg6: memref<8x16x128xf32, #tpu.memory_space<vmem>>, %arg7: memref<1x16x128xf32, #tpu.memory_space<vmem>>, %arg8: memref<16x128xf32, #tpu.memory_space<vmem>>, %arg9: memref<16x128xf32, #tpu.memory_space<vmem>>, %arg10: memref<128x512xf32, #tpu.memory_space<vmem>>) attributes {dimension_semantics = [#tpu.dimension_semantics<parallel>, #tpu.dimension_semantics<arbitrary>], iteration_bounds = array<i64: 1, 1>, scalar_prefetch = 0 : i64, scratch_operands = 3 : i64, tpu.core_type = #tpu.core_type<tc>, window_params = [{transform_indices = @transform_0, window_bounds = array<i64: 8, 16, 128>}, {pipeline_mode = #tpu.pipeline_mode<synchronous>, transform_indices = @transform_1, window_bounds = array<i64: 128, 512>}, {pipeline_mode = #tpu.pipeline_mode<synchronous>, transform_indices = @transform_2, window_bounds = array<i64: 128, 512>}, {pipeline_mode = #tpu.pipeline_mode<synchronous>, transform_indices = @transform_3, window_bounds = array<i64: 1, 512>}, {transform_indices = @transform_4, window_bounds = array<i64: 8, 16, 128>}, {transform_indices = @transform_5, window_bounds = array<i64: 1, 16, 128>}]} {
    %c0_i32 = arith.constant 0 : i32
    %0 = arith.cmpi eq, %arg1, %c0_i32 : i32
    %1 = arith.extui %0 : i1 to i32
    %c0_i32_0 = arith.constant 0 : i32
    %2 = arith.cmpi ne, %1, %c0_i32_0 : i32
    scf.if %2 {
      %cst_109 = arith.constant 0.000000e+00 : f32
      %307 = vector.broadcast %cst_109 : f32 to vector<16x128xf32>
      %c0_110 = arith.constant 0 : index
      %c0_111 = arith.constant 0 : index
      %308 = vector.load %arg8[%c0_110, %c0_111] : memref<16x128xf32, #tpu.memory_space<vmem>>, vector<16x128xf32>
      tpu.vector_store %arg8[%c0_110, %c0_111], %307 {strides = array<i32>} : memref<16x128xf32, #tpu.memory_space<vmem>>, vector<16x128xf32>,
      %cst_112 = arith.constant 0.000000e+00 : f32
      %309 = vector.broadcast %cst_112 : f32 to vector<16x128xf32>
      %c0_113 = arith.constant 0 : index
      %c0_114 = arith.constant 0 : index
      %310 = vector.load %arg9[%c0_113, %c0_114] : memref<16x128xf32, #tpu.memory_space<vmem>>, vector<16x128xf32>
      tpu.vector_store %arg9[%c0_113, %c0_114], %309 {strides = array<i32>} : memref<16x128xf32, #tpu.memory_space<vmem>>, vector<16x128xf32>,
    } else {
    }
    %c0 = arith.constant 0 : index
    %c0_1 = arith.constant 0 : index
    %c0_2 = arith.constant 0 : index
    %3 = vector.load %arg2[%c0, %c0_1, %c0_2] : memref<8x16x128xbf16, #tpu.memory_space<vmem>>, vector<8x16x128xbf16>
    %4 = vector.shape_cast %3 : vector<8x16x128xbf16> to vector<128x128xbf16>
    %c0_3 = arith.constant 0 : index
    %c0_4 = arith.constant 0 : index
    %5 = vector.load %arg3[%c0_3, %c0_4] : memref<128x512xbf16, #tpu.memory_space<vmem>>, vector<128x512xbf16>
    %cst = arith.constant dense<0.000000e+00> : vector<128x512xf32>
    %6 = tpu.matmul %4, %5, %cst {dimension_numbers = #tpu.dot_dimension_numbers<[1], [0], [0], [1], [0, 0, 1, 1], [], []>} : vector<128x128xbf16>, vector<128x512xbf16>, vector<128x512xf32> -> vector<128x512xf32>
    %c0_5 = arith.constant 0 : index
    %c0_6 = arith.constant 0 : index
    %7 = vector.load %arg5[%c0_5, %c0_6] : memref<1x512xf32, #tpu.memory_space<vmem>>, vector<1x512xf32>
    %8 = vector.broadcast %7 : vector<1x512xf32> to vector<128x512xf32>
    %9 = arith.addf %6, %8 : vector<128x512xf32>
    %c0_7 = arith.constant 0 : index
    %c0_8 = arith.constant 0 : index
    %10 = vector.load %arg10[%c0_7, %c0_8] : memref<128x512xf32, #tpu.memory_space<vmem>>, vector<128x512xf32>
    tpu.vector_store %arg10[%c0_7, %c0_8], %9 {strides = array<i32>} : memref<128x512xf32, #tpu.memory_space<vmem>>, vector<128x512xf32>,
    %c0_9 = arith.constant 0 : index
    %c0_10 = arith.constant 0 : index
    %11 = vector.load %arg4[%c0_9, %c0_10] : memref<128x512xbf16, #tpu.memory_space<vmem>>, vector<128x512xbf16>
    %c0_11 = arith.constant 0 : index
    %c0_12 = arith.constant 0 : index
    %12 = vector.load %arg8[%c0_11, %c0_12] : memref<16x128xf32, #tpu.memory_space<vmem>>, vector<16x128xf32>
    %c0_13 = arith.constant 0 : index
    %c0_14 = arith.constant 0 : index
    %13 = vector.load %arg9[%c0_13, %c0_14] : memref<16x128xf32, #tpu.memory_space<vmem>>, vector<16x128xf32>
    %c0_i32_15 = arith.constant 0 : i32
    %c16_i32 = arith.constant 16 : i32
    %14 = arith.muli %c0_i32_15, %c16_i32 : i32
    %15 = tpu.assume_multiple %14, 16 : i32
    %16 = arith.index_cast %15 : i32 to index
    %c0_16 = arith.constant 0 : index
    %17 = vector.load %arg10[%16, %c0_16] : memref<128x512xf32, #tpu.memory_space<vmem>>, vector<16x512xf32>
    %18 = arith.truncf %12 : vector<16x128xf32> to vector<16x128xbf16>
    %cst_17 = arith.constant dense<0.000000e+00> : vector<16x512xf32>
    %19 = tpu.matmul %18, %11, %cst_17 {dimension_numbers = #tpu.dot_dimension_numbers<[1], [0], [0], [1], [0, 0, 1, 1], [], []>} : vector<16x128xbf16>, vector<128x512xbf16>, vector<16x512xf32> -> vector<16x512xf32>
    %20 = arith.addf %17, %19 : vector<16x512xf32>
    %21 = vector.extract_strided_slice %20 {offsets = [0, 0], sizes = [16, 128], strides = [1, 1]} : vector<16x512xf32> to vector<16x128xf32>
    %22 = math.tanh %21 : vector<16x128xf32>
    %cst_18 = arith.constant 5.000000e-01 : f32
    %23 = vector.broadcast %cst_18 : f32 to vector<16x128xf32>
    %24 = arith.mulf %23, %22 : vector<16x128xf32>
    %cst_19 = arith.constant 5.000000e-01 : f32
    %25 = vector.broadcast %cst_19 : f32 to vector<16x128xf32>
    %26 = arith.addf %24, %25 : vector<16x128xf32>
    %27 = vector.extract_strided_slice %20 {offsets = [0, 128], sizes = [16, 128], strides = [1, 1]} : vector<16x512xf32> to vector<16x128xf32>
    %28 = math.tanh %27 : vector<16x128xf32>
    %cst_20 = arith.constant 5.000000e-01 : f32
    %29 = vector.broadcast %cst_20 : f32 to vector<16x128xf32>
    %30 = arith.mulf %29, %28 : vector<16x128xf32>
    %cst_21 = arith.constant 5.000000e-01 : f32
    %31 = vector.broadcast %cst_21 : f32 to vector<16x128xf32>
    %32 = arith.addf %30, %31 : vector<16x128xf32>
    %33 = vector.extract_strided_slice %20 {offsets = [0, 256], sizes = [16, 128], strides = [1, 1]} : vector<16x512xf32> to vector<16x128xf32>
    %34 = math.tanh %33 : vector<16x128xf32>
    %cst_22 = arith.constant 5.000000e-01 : f32
    %35 = vector.broadcast %cst_22 : f32 to vector<16x128xf32>
    %36 = arith.mulf %35, %34 : vector<16x128xf32>
    %cst_23 = arith.constant 5.000000e-01 : f32
    %37 = vector.broadcast %cst_23 : f32 to vector<16x128xf32>
    %38 = arith.addf %36, %37 : vector<16x128xf32>
    %39 = vector.extract_strided_slice %20 {offsets = [0, 384], sizes = [16, 128], strides = [1, 1]} : vector<16x512xf32> to vector<16x128xf32>
    %40 = math.tanh %39 : vector<16x128xf32>
    %41 = arith.mulf %26, %13 : vector<16x128xf32>
    %42 = arith.mulf %32, %40 : vector<16x128xf32>
    %43 = arith.addf %41, %42 : vector<16x128xf32>
    %44 = math.tanh %43 : vector<16x128xf32>
    %45 = arith.mulf %38, %44 : vector<16x128xf32>
    %46 = arith.index_cast %c0_i32_15 : i32 to index
    %c0_24 = arith.constant 0 : index
    %c0_25 = arith.constant 0 : index
    %47 = vector.load %arg6[%46, %c0_24, %c0_25] : memref<8x16x128xf32, #tpu.memory_space<vmem>>, vector<1x16x128xf32>
    %48 = vector.shape_cast %47 : vector<1x16x128xf32> to vector<16x128xf32>
    %49 = vector.shape_cast %45 : vector<16x128xf32> to vector<1x16x128xf32>
    tpu.vector_store %arg6[%46, %c0_24, %c0_25], %49 {strides = array<i32>} : memref<8x16x128xf32, #tpu.memory_space<vmem>>, vector<1x16x128xf32>,
    %c1_i32 = arith.constant 1 : i32
    %c16_i32_26 = arith.constant 16 : i32
    %50 = arith.muli %c1_i32, %c16_i32_26 : i32
    %51 = tpu.assume_multiple %50, 16 : i32
    %52 = arith.index_cast %51 : i32 to index
    %c0_27 = arith.constant 0 : index
    %53 = vector.load %arg10[%52, %c0_27] : memref<128x512xf32, #tpu.memory_space<vmem>>, vector<16x512xf32>
    %54 = arith.truncf %45 : vector<16x128xf32> to vector<16x128xbf16>
    %cst_28 = arith.constant dense<0.000000e+00> : vector<16x512xf32>
    %55 = tpu.matmul %54, %11, %cst_28 {dimension_numbers = #tpu.dot_dimension_numbers<[1], [0], [0], [1], [0, 0, 1, 1], [], []>} : vector<16x128xbf16>, vector<128x512xbf16>, vector<16x512xf32> -> vector<16x512xf32>
    %56 = arith.addf %53, %55 : vector<16x512xf32>
    %57 = vector.extract_strided_slice %56 {offsets = [0, 0], sizes = [16, 128], strides = [1, 1]} : vector<16x512xf32> to vector<16x128xf32>
    %58 = math.tanh %57 : vector<16x128xf32>
    %cst_29 = arith.constant 5.000000e-01 : f32
    %59 = vector.broadcast %cst_29 : f32 to vector<16x128xf32>
    %60 = arith.mulf %59, %58 : vector<16x128xf32>
    %cst_30 = arith.constant 5.000000e-01 : f32
    %61 = vector.broadcast %cst_30 : f32 to vector<16x128xf32>
    %62 = arith.addf %60, %61 : vector<16x128xf32>
    %63 = vector.extract_strided_slice %56 {offsets = [0, 128], sizes = [16, 128], strides = [1, 1]} : vector<16x512xf32> to vector<16x128xf32>
    %64 = math.tanh %63 : vector<16x128xf32>
    %cst_31 = arith.constant 5.000000e-01 : f32
    %65 = vector.broadcast %cst_31 : f32 to vector<16x128xf32>
    %66 = arith.mulf %65, %64 : vector<16x128xf32>
    %cst_32 = arith.constant 5.000000e-01 : f32
    %67 = vector.broadcast %cst_32 : f32 to vector<16x128xf32>
    %68 = arith.addf %66, %67 : vector<16x128xf32>
    %69 = vector.extract_strided_slice %56 {offsets = [0, 256], sizes = [16, 128], strides = [1, 1]} : vector<16x512xf32> to vector<16x128xf32>
    %70 = math.tanh %69 : vector<16x128xf32>
    %cst_33 = arith.constant 5.000000e-01 : f32
    %71 = vector.broadcast %cst_33 : f32 to vector<16x128xf32>
    %72 = arith.mulf %71, %70 : vector<16x128xf32>
    %cst_34 = arith.constant 5.000000e-01 : f32
    %73 = vector.broadcast %cst_34 : f32 to vector<16x128xf32>
    %74 = arith.addf %72, %73 : vector<16x128xf32>
    %75 = vector.extract_strided_slice %56 {offsets = [0, 384], sizes = [16, 128], strides = [1, 1]} : vector<16x512xf32> to vector<16x128xf32>
    %76 = math.tanh %75 : vector<16x128xf32>
    %77 = arith.mulf %62, %43 : vector<16x128xf32>
    %78 = arith.mulf %68, %76 : vector<16x128xf32>
    %79 = arith.addf %77, %78 : vector<16x128xf32>
    %80 = math.tanh %79 : vector<16x128xf32>
    %81 = arith.mulf %74, %80 : vector<16x128xf32>
    %82 = arith.index_cast %c1_i32 : i32 to index
    %c0_35 = arith.constant 0 : index
    %c0_36 = arith.constant 0 : index
    %83 = vector.load %arg6[%82, %c0_35, %c0_36] : memref<8x16x128xf32, #tpu.memory_space<vmem>>, vector<1x16x128xf32>
    %84 = vector.shape_cast %83 : vector<1x16x128xf32> to vector<16x128xf32>
    %85 = vector.shape_cast %81 : vector<16x128xf32> to vector<1x16x128xf32>
    tpu.vector_store %arg6[%82, %c0_35, %c0_36], %85 {strides = array<i32>} : memref<8x16x128xf32, #tpu.memory_space<vmem>>, vector<1x16x128xf32>,
    %c2_i32 = arith.constant 2 : i32
    %c16_i32_37 = arith.constant 16 : i32
    %86 = arith.muli %c2_i32, %c16_i32_37 : i32
    %87 = tpu.assume_multiple %86, 16 : i32
    %88 = arith.index_cast %87 : i32 to index
    %c0_38 = arith.constant 0 : index
    %89 = vector.load %arg10[%88, %c0_38] : memref<128x512xf32, #tpu.memory_space<vmem>>, vector<16x512xf32>
    %90 = arith.truncf %81 : vector<16x128xf32> to vector<16x128xbf16>
    %cst_39 = arith.constant dense<0.000000e+00> : vector<16x512xf32>
    %91 = tpu.matmul %90, %11, %cst_39 {dimension_numbers = #tpu.dot_dimension_numbers<[1], [0], [0], [1], [0, 0, 1, 1], [], []>} : vector<16x128xbf16>, vector<128x512xbf16>, vector<16x512xf32> -> vector<16x512xf32>
    %92 = arith.addf %89, %91 : vector<16x512xf32>
    %93 = vector.extract_strided_slice %92 {offsets = [0, 0], sizes = [16, 128], strides = [1, 1]} : vector<16x512xf32> to vector<16x128xf32>
    %94 = math.tanh %93 : vector<16x128xf32>
    %cst_40 = arith.constant 5.000000e-01 : f32
    %95 = vector.broadcast %cst_40 : f32 to vector<16x128xf32>
    %96 = arith.mulf %95, %94 : vector<16x128xf32>
    %cst_41 = arith.constant 5.000000e-01 : f32
    %97 = vector.broadcast %cst_41 : f32 to vector<16x128xf32>
    %98 = arith.addf %96, %97 : vector<16x128xf32>
    %99 = vector.extract_strided_slice %92 {offsets = [0, 128], sizes = [16, 128], strides = [1, 1]} : vector<16x512xf32> to vector<16x128xf32>
    %100 = math.tanh %99 : vector<16x128xf32>
    %cst_42 = arith.constant 5.000000e-01 : f32
    %101 = vector.broadcast %cst_42 : f32 to vector<16x128xf32>
    %102 = arith.mulf %101, %100 : vector<16x128xf32>
    %cst_43 = arith.constant 5.000000e-01 : f32
    %103 = vector.broadcast %cst_43 : f32 to vector<16x128xf32>
    %104 = arith.addf %102, %103 : vector<16x128xf32>
    %105 = vector.extract_strided_slice %92 {offsets = [0, 256], sizes = [16, 128], strides = [1, 1]} : vector<16x512xf32> to vector<16x128xf32>
    %106 = math.tanh %105 : vector<16x128xf32>
    %cst_44 = arith.constant 5.000000e-01 : f32
    %107 = vector.broadcast %cst_44 : f32 to vector<16x128xf32>
    %108 = arith.mulf %107, %106 : vector<16x128xf32>
    %cst_45 = arith.constant 5.000000e-01 : f32
    %109 = vector.broadcast %cst_45 : f32 to vector<16x128xf32>
    %110 = arith.addf %108, %109 : vector<16x128xf32>
    %111 = vector.extract_strided_slice %92 {offsets = [0, 384], sizes = [16, 128], strides = [1, 1]} : vector<16x512xf32> to vector<16x128xf32>
    %112 = math.tanh %111 : vector<16x128xf32>
    %113 = arith.mulf %98, %79 : vector<16x128xf32>
    %114 = arith.mulf %104, %112 : vector<16x128xf32>
    %115 = arith.addf %113, %114 : vector<16x128xf32>
    %116 = math.tanh %115 : vector<16x128xf32>
    %117 = arith.mulf %110, %116 : vector<16x128xf32>
    %118 = arith.index_cast %c2_i32 : i32 to index
    %c0_46 = arith.constant 0 : index
    %c0_47 = arith.constant 0 : index
    %119 = vector.load %arg6[%118, %c0_46, %c0_47] : memref<8x16x128xf32, #tpu.memory_space<vmem>>, vector<1x16x128xf32>
    %120 = vector.shape_cast %119 : vector<1x16x128xf32> to vector<16x128xf32>
    %121 = vector.shape_cast %117 : vector<16x128xf32> to vector<1x16x128xf32>
    tpu.vector_store %arg6[%118, %c0_46, %c0_47], %121 {strides = array<i32>} : memref<8x16x128xf32, #tpu.memory_space<vmem>>, vector<1x16x128xf32>,
    %c3_i32 = arith.constant 3 : i32
    %c16_i32_48 = arith.constant 16 : i32
    %122 = arith.muli %c3_i32, %c16_i32_48 : i32
    %123 = tpu.assume_multiple %122, 16 : i32
    %124 = arith.index_cast %123 : i32 to index
    %c0_49 = arith.constant 0 : index
    %125 = vector.load %arg10[%124, %c0_49] : memref<128x512xf32, #tpu.memory_space<vmem>>, vector<16x512xf32>
    %126 = arith.truncf %117 : vector<16x128xf32> to vector<16x128xbf16>
    %cst_50 = arith.constant dense<0.000000e+00> : vector<16x512xf32>
    %127 = tpu.matmul %126, %11, %cst_50 {dimension_numbers = #tpu.dot_dimension_numbers<[1], [0], [0], [1], [0, 0, 1, 1], [], []>} : vector<16x128xbf16>, vector<128x512xbf16>, vector<16x512xf32> -> vector<16x512xf32>
    %128 = arith.addf %125, %127 : vector<16x512xf32>
    %129 = vector.extract_strided_slice %128 {offsets = [0, 0], sizes = [16, 128], strides = [1, 1]} : vector<16x512xf32> to vector<16x128xf32>
    %130 = math.tanh %129 : vector<16x128xf32>
    %cst_51 = arith.constant 5.000000e-01 : f32
    %131 = vector.broadcast %cst_51 : f32 to vector<16x128xf32>
    %132 = arith.mulf %131, %130 : vector<16x128xf32>
    %cst_52 = arith.constant 5.000000e-01 : f32
    %133 = vector.broadcast %cst_52 : f32 to vector<16x128xf32>
    %134 = arith.addf %132, %133 : vector<16x128xf32>
    %135 = vector.extract_strided_slice %128 {offsets = [0, 128], sizes = [16, 128], strides = [1, 1]} : vector<16x512xf32> to vector<16x128xf32>
    %136 = math.tanh %135 : vector<16x128xf32>
    %cst_53 = arith.constant 5.000000e-01 : f32
    %137 = vector.broadcast %cst_53 : f32 to vector<16x128xf32>
    %138 = arith.mulf %137, %136 : vector<16x128xf32>
    %cst_54 = arith.constant 5.000000e-01 : f32
    %139 = vector.broadcast %cst_54 : f32 to vector<16x128xf32>
    %140 = arith.addf %138, %139 : vector<16x128xf32>
    %141 = vector.extract_strided_slice %128 {offsets = [0, 256], sizes = [16, 128], strides = [1, 1]} : vector<16x512xf32> to vector<16x128xf32>
    %142 = math.tanh %141 : vector<16x128xf32>
    %cst_55 = arith.constant 5.000000e-01 : f32
    %143 = vector.broadcast %cst_55 : f32 to vector<16x128xf32>
    %144 = arith.mulf %143, %142 : vector<16x128xf32>
    %cst_56 = arith.constant 5.000000e-01 : f32
    %145 = vector.broadcast %cst_56 : f32 to vector<16x128xf32>
    %146 = arith.addf %144, %145 : vector<16x128xf32>
    %147 = vector.extract_strided_slice %128 {offsets = [0, 384], sizes = [16, 128], strides = [1, 1]} : vector<16x512xf32> to vector<16x128xf32>
    %148 = math.tanh %147 : vector<16x128xf32>
    %149 = arith.mulf %134, %115 : vector<16x128xf32>
    %150 = arith.mulf %140, %148 : vector<16x128xf32>
    %151 = arith.addf %149, %150 : vector<16x128xf32>
    %152 = math.tanh %151 : vector<16x128xf32>
    %153 = arith.mulf %146, %152 : vector<16x128xf32>
    %154 = arith.index_cast %c3_i32 : i32 to index
    %c0_57 = arith.constant 0 : index
    %c0_58 = arith.constant 0 : index
    %155 = vector.load %arg6[%154, %c0_57, %c0_58] : memref<8x16x128xf32, #tpu.memory_space<vmem>>, vector<1x16x128xf32>
    %156 = vector.shape_cast %155 : vector<1x16x128xf32> to vector<16x128xf32>
    %157 = vector.shape_cast %153 : vector<16x128xf32> to vector<1x16x128xf32>
    tpu.vector_store %arg6[%154, %c0_57, %c0_58], %157 {strides = array<i32>} : memref<8x16x128xf32, #tpu.memory_space<vmem>>, vector<1x16x128xf32>,
    %c4_i32 = arith.constant 4 : i32
    %c16_i32_59 = arith.constant 16 : i32
    %158 = arith.muli %c4_i32, %c16_i32_59 : i32
    %159 = tpu.assume_multiple %158, 16 : i32
    %160 = arith.index_cast %159 : i32 to index
    %c0_60 = arith.constant 0 : index
    %161 = vector.load %arg10[%160, %c0_60] : memref<128x512xf32, #tpu.memory_space<vmem>>, vector<16x512xf32>
    %162 = arith.truncf %153 : vector<16x128xf32> to vector<16x128xbf16>
    %cst_61 = arith.constant dense<0.000000e+00> : vector<16x512xf32>
    %163 = tpu.matmul %162, %11, %cst_61 {dimension_numbers = #tpu.dot_dimension_numbers<[1], [0], [0], [1], [0, 0, 1, 1], [], []>} : vector<16x128xbf16>, vector<128x512xbf16>, vector<16x512xf32> -> vector<16x512xf32>
    %164 = arith.addf %161, %163 : vector<16x512xf32>
    %165 = vector.extract_strided_slice %164 {offsets = [0, 0], sizes = [16, 128], strides = [1, 1]} : vector<16x512xf32> to vector<16x128xf32>
    %166 = math.tanh %165 : vector<16x128xf32>
    %cst_62 = arith.constant 5.000000e-01 : f32
    %167 = vector.broadcast %cst_62 : f32 to vector<16x128xf32>
    %168 = arith.mulf %167, %166 : vector<16x128xf32>
    %cst_63 = arith.constant 5.000000e-01 : f32
    %169 = vector.broadcast %cst_63 : f32 to vector<16x128xf32>
    %170 = arith.addf %168, %169 : vector<16x128xf32>
    %171 = vector.extract_strided_slice %164 {offsets = [0, 128], sizes = [16, 128], strides = [1, 1]} : vector<16x512xf32> to vector<16x128xf32>
    %172 = math.tanh %171 : vector<16x128xf32>
    %cst_64 = arith.constant 5.000000e-01 : f32
    %173 = vector.broadcast %cst_64 : f32 to vector<16x128xf32>
    %174 = arith.mulf %173, %172 : vector<16x128xf32>
    %cst_65 = arith.constant 5.000000e-01 : f32
    %175 = vector.broadcast %cst_65 : f32 to vector<16x128xf32>
    %176 = arith.addf %174, %175 : vector<16x128xf32>
    %177 = vector.extract_strided_slice %164 {offsets = [0, 256], sizes = [16, 128], strides = [1, 1]} : vector<16x512xf32> to vector<16x128xf32>
    %178 = math.tanh %177 : vector<16x128xf32>
    %cst_66 = arith.constant 5.000000e-01 : f32
    %179 = vector.broadcast %cst_66 : f32 to vector<16x128xf32>
    %180 = arith.mulf %179, %178 : vector<16x128xf32>
    %cst_67 = arith.constant 5.000000e-01 : f32
    %181 = vector.broadcast %cst_67 : f32 to vector<16x128xf32>
    %182 = arith.addf %180, %181 : vector<16x128xf32>
    %183 = vector.extract_strided_slice %164 {offsets = [0, 384], sizes = [16, 128], strides = [1, 1]} : vector<16x512xf32> to vector<16x128xf32>
    %184 = math.tanh %183 : vector<16x128xf32>
    %185 = arith.mulf %170, %151 : vector<16x128xf32>
    %186 = arith.mulf %176, %184 : vector<16x128xf32>
    %187 = arith.addf %185, %186 : vector<16x128xf32>
    %188 = math.tanh %187 : vector<16x128xf32>
    %189 = arith.mulf %182, %188 : vector<16x128xf32>
    %190 = arith.index_cast %c4_i32 : i32 to index
    %c0_68 = arith.constant 0 : index
    %c0_69 = arith.constant 0 : index
    %191 = vector.load %arg6[%190, %c0_68, %c0_69] : memref<8x16x128xf32, #tpu.memory_space<vmem>>, vector<1x16x128xf32>
    %192 = vector.shape_cast %191 : vector<1x16x128xf32> to vector<16x128xf32>
    %193 = vector.shape_cast %189 : vector<16x128xf32> to vector<1x16x128xf32>
    tpu.vector_store %arg6[%190, %c0_68, %c0_69], %193 {strides = array<i32>} : memref<8x16x128xf32, #tpu.memory_space<vmem>>, vector<1x16x128xf32>,
    %c5_i32 = arith.constant 5 : i32
    %c16_i32_70 = arith.constant 16 : i32
    %194 = arith.muli %c5_i32, %c16_i32_70 : i32
    %195 = tpu.assume_multiple %194, 16 : i32
    %196 = arith.index_cast %195 : i32 to index
    %c0_71 = arith.constant 0 : index
    %197 = vector.load %arg10[%196, %c0_71] : memref<128x512xf32, #tpu.memory_space<vmem>>, vector<16x512xf32>
    %198 = arith.truncf %189 : vector<16x128xf32> to vector<16x128xbf16>
    %cst_72 = arith.constant dense<0.000000e+00> : vector<16x512xf32>
    %199 = tpu.matmul %198, %11, %cst_72 {dimension_numbers = #tpu.dot_dimension_numbers<[1], [0], [0], [1], [0, 0, 1, 1], [], []>} : vector<16x128xbf16>, vector<128x512xbf16>, vector<16x512xf32> -> vector<16x512xf32>
    %200 = arith.addf %197, %199 : vector<16x512xf32>
    %201 = vector.extract_strided_slice %200 {offsets = [0, 0], sizes = [16, 128], strides = [1, 1]} : vector<16x512xf32> to vector<16x128xf32>
    %202 = math.tanh %201 : vector<16x128xf32>
    %cst_73 = arith.constant 5.000000e-01 : f32
    %203 = vector.broadcast %cst_73 : f32 to vector<16x128xf32>
    %204 = arith.mulf %203, %202 : vector<16x128xf32>
    %cst_74 = arith.constant 5.000000e-01 : f32
    %205 = vector.broadcast %cst_74 : f32 to vector<16x128xf32>
    %206 = arith.addf %204, %205 : vector<16x128xf32>
    %207 = vector.extract_strided_slice %200 {offsets = [0, 128], sizes = [16, 128], strides = [1, 1]} : vector<16x512xf32> to vector<16x128xf32>
    %208 = math.tanh %207 : vector<16x128xf32>
    %cst_75 = arith.constant 5.000000e-01 : f32
    %209 = vector.broadcast %cst_75 : f32 to vector<16x128xf32>
    %210 = arith.mulf %209, %208 : vector<16x128xf32>
    %cst_76 = arith.constant 5.000000e-01 : f32
    %211 = vector.broadcast %cst_76 : f32 to vector<16x128xf32>
    %212 = arith.addf %210, %211 : vector<16x128xf32>
    %213 = vector.extract_strided_slice %200 {offsets = [0, 256], sizes = [16, 128], strides = [1, 1]} : vector<16x512xf32> to vector<16x128xf32>
    %214 = math.tanh %213 : vector<16x128xf32>
    %cst_77 = arith.constant 5.000000e-01 : f32
    %215 = vector.broadcast %cst_77 : f32 to vector<16x128xf32>
    %216 = arith.mulf %215, %214 : vector<16x128xf32>
    %cst_78 = arith.constant 5.000000e-01 : f32
    %217 = vector.broadcast %cst_78 : f32 to vector<16x128xf32>
    %218 = arith.addf %216, %217 : vector<16x128xf32>
    %219 = vector.extract_strided_slice %200 {offsets = [0, 384], sizes = [16, 128], strides = [1, 1]} : vector<16x512xf32> to vector<16x128xf32>
    %220 = math.tanh %219 : vector<16x128xf32>
    %221 = arith.mulf %206, %187 : vector<16x128xf32>
    %222 = arith.mulf %212, %220 : vector<16x128xf32>
    %223 = arith.addf %221, %222 : vector<16x128xf32>
    %224 = math.tanh %223 : vector<16x128xf32>
    %225 = arith.mulf %218, %224 : vector<16x128xf32>
    %226 = arith.index_cast %c5_i32 : i32 to index
    %c0_79 = arith.constant 0 : index
    %c0_80 = arith.constant 0 : index
    %227 = vector.load %arg6[%226, %c0_79, %c0_80] : memref<8x16x128xf32, #tpu.memory_space<vmem>>, vector<1x16x128xf32>
    %228 = vector.shape_cast %227 : vector<1x16x128xf32> to vector<16x128xf32>
    %229 = vector.shape_cast %225 : vector<16x128xf32> to vector<1x16x128xf32>
    tpu.vector_store %arg6[%226, %c0_79, %c0_80], %229 {strides = array<i32>} : memref<8x16x128xf32, #tpu.memory_space<vmem>>, vector<1x16x128xf32>,
    %c6_i32 = arith.constant 6 : i32
    %c16_i32_81 = arith.constant 16 : i32
    %230 = arith.muli %c6_i32, %c16_i32_81 : i32
    %231 = tpu.assume_multiple %230, 16 : i32
    %232 = arith.index_cast %231 : i32 to index
    %c0_82 = arith.constant 0 : index
    %233 = vector.load %arg10[%232, %c0_82] : memref<128x512xf32, #tpu.memory_space<vmem>>, vector<16x512xf32>
    %234 = arith.truncf %225 : vector<16x128xf32> to vector<16x128xbf16>
    %cst_83 = arith.constant dense<0.000000e+00> : vector<16x512xf32>
    %235 = tpu.matmul %234, %11, %cst_83 {dimension_numbers = #tpu.dot_dimension_numbers<[1], [0], [0], [1], [0, 0, 1, 1], [], []>} : vector<16x128xbf16>, vector<128x512xbf16>, vector<16x512xf32> -> vector<16x512xf32>
    %236 = arith.addf %233, %235 : vector<16x512xf32>
    %237 = vector.extract_strided_slice %236 {offsets = [0, 0], sizes = [16, 128], strides = [1, 1]} : vector<16x512xf32> to vector<16x128xf32>
    %238 = math.tanh %237 : vector<16x128xf32>
    %cst_84 = arith.constant 5.000000e-01 : f32
    %239 = vector.broadcast %cst_84 : f32 to vector<16x128xf32>
    %240 = arith.mulf %239, %238 : vector<16x128xf32>
    %cst_85 = arith.constant 5.000000e-01 : f32
    %241 = vector.broadcast %cst_85 : f32 to vector<16x128xf32>
    %242 = arith.addf %240, %241 : vector<16x128xf32>
    %243 = vector.extract_strided_slice %236 {offsets = [0, 128], sizes = [16, 128], strides = [1, 1]} : vector<16x512xf32> to vector<16x128xf32>
    %244 = math.tanh %243 : vector<16x128xf32>
    %cst_86 = arith.constant 5.000000e-01 : f32
    %245 = vector.broadcast %cst_86 : f32 to vector<16x128xf32>
    %246 = arith.mulf %245, %244 : vector<16x128xf32>
    %cst_87 = arith.constant 5.000000e-01 : f32
    %247 = vector.broadcast %cst_87 : f32 to vector<16x128xf32>
    %248 = arith.addf %246, %247 : vector<16x128xf32>
    %249 = vector.extract_strided_slice %236 {offsets = [0, 256], sizes = [16, 128], strides = [1, 1]} : vector<16x512xf32> to vector<16x128xf32>
    %250 = math.tanh %249 : vector<16x128xf32>
    %cst_88 = arith.constant 5.000000e-01 : f32
    %251 = vector.broadcast %cst_88 : f32 to vector<16x128xf32>
    %252 = arith.mulf %251, %250 : vector<16x128xf32>
    %cst_89 = arith.constant 5.000000e-01 : f32
    %253 = vector.broadcast %cst_89 : f32 to vector<16x128xf32>
    %254 = arith.addf %252, %253 : vector<16x128xf32>
    %255 = vector.extract_strided_slice %236 {offsets = [0, 384], sizes = [16, 128], strides = [1, 1]} : vector<16x512xf32> to vector<16x128xf32>
    %256 = math.tanh %255 : vector<16x128xf32>
    %257 = arith.mulf %242, %223 : vector<16x128xf32>
    %258 = arith.mulf %248, %256 : vector<16x128xf32>
    %259 = arith.addf %257, %258 : vector<16x128xf32>
    %260 = math.tanh %259 : vector<16x128xf32>
    %261 = arith.mulf %254, %260 : vector<16x128xf32>
    %262 = arith.index_cast %c6_i32 : i32 to index
    %c0_90 = arith.constant 0 : index
    %c0_91 = arith.constant 0 : index
    %263 = vector.load %arg6[%262, %c0_90, %c0_91] : memref<8x16x128xf32, #tpu.memory_space<vmem>>, vector<1x16x128xf32>
    %264 = vector.shape_cast %263 : vector<1x16x128xf32> to vector<16x128xf32>
    %265 = vector.shape_cast %261 : vector<16x128xf32> to vector<1x16x128xf32>
    tpu.vector_store %arg6[%262, %c0_90, %c0_91], %265 {strides = array<i32>} : memref<8x16x128xf32, #tpu.memory_space<vmem>>, vector<1x16x128xf32>,
    %c7_i32 = arith.constant 7 : i32
    %c16_i32_92 = arith.constant 16 : i32
    %266 = arith.muli %c7_i32, %c16_i32_92 : i32
    %267 = tpu.assume_multiple %266, 16 : i32
    %268 = arith.index_cast %267 : i32 to index
    %c0_93 = arith.constant 0 : index
    %269 = vector.load %arg10[%268, %c0_93] : memref<128x512xf32, #tpu.memory_space<vmem>>, vector<16x512xf32>
    %270 = arith.truncf %261 : vector<16x128xf32> to vector<16x128xbf16>
    %cst_94 = arith.constant dense<0.000000e+00> : vector<16x512xf32>
    %271 = tpu.matmul %270, %11, %cst_94 {dimension_numbers = #tpu.dot_dimension_numbers<[1], [0], [0], [1], [0, 0, 1, 1], [], []>} : vector<16x128xbf16>, vector<128x512xbf16>, vector<16x512xf32> -> vector<16x512xf32>
    %272 = arith.addf %269, %271 : vector<16x512xf32>
    %273 = vector.extract_strided_slice %272 {offsets = [0, 0], sizes = [16, 128], strides = [1, 1]} : vector<16x512xf32> to vector<16x128xf32>
    %274 = math.tanh %273 : vector<16x128xf32>
    %cst_95 = arith.constant 5.000000e-01 : f32
    %275 = vector.broadcast %cst_95 : f32 to vector<16x128xf32>
    %276 = arith.mulf %275, %274 : vector<16x128xf32>
    %cst_96 = arith.constant 5.000000e-01 : f32
    %277 = vector.broadcast %cst_96 : f32 to vector<16x128xf32>
    %278 = arith.addf %276, %277 : vector<16x128xf32>
    %279 = vector.extract_strided_slice %272 {offsets = [0, 128], sizes = [16, 128], strides = [1, 1]} : vector<16x512xf32> to vector<16x128xf32>
    %280 = math.tanh %279 : vector<16x128xf32>
    %cst_97 = arith.constant 5.000000e-01 : f32
    %281 = vector.broadcast %cst_97 : f32 to vector<16x128xf32>
    %282 = arith.mulf %281, %280 : vector<16x128xf32>
    %cst_98 = arith.constant 5.000000e-01 : f32
    %283 = vector.broadcast %cst_98 : f32 to vector<16x128xf32>
    %284 = arith.addf %282, %283 : vector<16x128xf32>
    %285 = vector.extract_strided_slice %272 {offsets = [0, 256], sizes = [16, 128], strides = [1, 1]} : vector<16x512xf32> to vector<16x128xf32>
    %286 = math.tanh %285 : vector<16x128xf32>
    %cst_99 = arith.constant 5.000000e-01 : f32
    %287 = vector.broadcast %cst_99 : f32 to vector<16x128xf32>
    %288 = arith.mulf %287, %286 : vector<16x128xf32>
    %cst_100 = arith.constant 5.000000e-01 : f32
    %289 = vector.broadcast %cst_100 : f32 to vector<16x128xf32>
    %290 = arith.addf %288, %289 : vector<16x128xf32>
    %291 = vector.extract_strided_slice %272 {offsets = [0, 384], sizes = [16, 128], strides = [1, 1]} : vector<16x512xf32> to vector<16x128xf32>
    %292 = math.tanh %291 : vector<16x128xf32>
    %293 = arith.mulf %278, %259 : vector<16x128xf32>
    %294 = arith.mulf %284, %292 : vector<16x128xf32>
    %295 = arith.addf %293, %294 : vector<16x128xf32>
    %296 = math.tanh %295 : vector<16x128xf32>
    %297 = arith.mulf %290, %296 : vector<16x128xf32>
    %298 = arith.index_cast %c7_i32 : i32 to index
    %c0_101 = arith.constant 0 : index
    %c0_102 = arith.constant 0 : index
    %299 = vector.load %arg6[%298, %c0_101, %c0_102] : memref<8x16x128xf32, #tpu.memory_space<vmem>>, vector<1x16x128xf32>
    %300 = vector.shape_cast %299 : vector<1x16x128xf32> to vector<16x128xf32>
    %301 = vector.shape_cast %297 : vector<16x128xf32> to vector<1x16x128xf32>
    tpu.vector_store %arg6[%298, %c0_101, %c0_102], %301 {strides = array<i32>} : memref<8x16x128xf32, #tpu.memory_space<vmem>>, vector<1x16x128xf32>,
    %c8_i32 = arith.constant 8 : i32
    %c0_103 = arith.constant 0 : index
    %c0_104 = arith.constant 0 : index
    %302 = vector.load %arg8[%c0_103, %c0_104] : memref<16x128xf32, #tpu.memory_space<vmem>>, vector<16x128xf32>
    tpu.vector_store %arg8[%c0_103, %c0_104], %297 {strides = array<i32>} : memref<16x128xf32, #tpu.memory_space<vmem>>, vector<16x128xf32>,
    %c0_105 = arith.constant 0 : index
    %c0_106 = arith.constant 0 : index
    %303 = vector.load %arg9[%c0_105, %c0_106] : memref<16x128xf32, #tpu.memory_space<vmem>>, vector<16x128xf32>
    tpu.vector_store %arg9[%c0_105, %c0_106], %295 {strides = array<i32>} : memref<16x128xf32, #tpu.memory_space<vmem>>, vector<16x128xf32>,
    %c0_i32_107 = arith.constant 0 : i32
    %304 = arith.cmpi eq, %arg1, %c0_i32_107 : i32
    %305 = arith.extui %304 : i1 to i32
    %c0_i32_108 = arith.constant 0 : i32
    %306 = arith.cmpi ne, %305, %c0_i32_108 : i32
    scf.if %306 {
      %c0_109 = arith.constant 0 : index
      %c0_110 = arith.constant 0 : index
      %c0_111 = arith.constant 0 : index
      %307 = vector.load %arg7[%c0_109, %c0_110, %c0_111] : memref<1x16x128xf32, #tpu.memory_space<vmem>>, vector<1x16x128xf32>
      %308 = vector.shape_cast %307 : vector<1x16x128xf32> to vector<16x128xf32>
      %309 = vector.shape_cast %295 : vector<16x128xf32> to vector<1x16x128xf32>
      tpu.vector_store %arg7[%c0_109, %c0_110, %c0_111], %309 {strides = array<i32>} : memref<1x16x128xf32, #tpu.memory_space<vmem>>, vector<1x16x128xf32>,
    } else {
    }
    return
  }
  func.func @transform_0(%arg0: i32, %arg1: i32) -> (i32, i32, i32) {
    %c0_i32 = arith.constant 0 : i32
    %c0_i32_0 = arith.constant 0 : i32
    return %arg1, %arg0, %c0_i32 : i32, i32, i32
  }
  func.func @transform_1(%arg0: i32, %arg1: i32) -> (i32, i32) {
    %c0_i32 = arith.constant 0 : i32
    %c0_i32_0 = arith.constant 0 : i32
    %c0_i32_1 = arith.constant 0 : i32
    return %c0_i32, %c0_i32_0 : i32, i32
  }
  func.func @transform_2(%arg0: i32, %arg1: i32) -> (i32, i32) {
    %c0_i32 = arith.constant 0 : i32
    %c0_i32_0 = arith.constant 0 : i32
    %c0_i32_1 = arith.constant 0 : i32
    return %c0_i32, %c0_i32_0 : i32, i32
  }
  func.func @transform_3(%arg0: i32, %arg1: i32) -> (i32, i32) {
    %c0_i32 = arith.constant 0 : i32
    %c0_i32_0 = arith.constant 0 : i32
    %c0_i32_1 = arith.constant 0 : i32
    return %c0_i32, %c0_i32_0 : i32, i32
  }
  func.func @transform_4(%arg0: i32, %arg1: i32) -> (i32, i32, i32) {
    %c0_i32 = arith.constant 0 : i32
    %c0_i32_0 = arith.constant 0 : i32
    return %arg1, %arg0, %c0_i32 : i32, i32, i32
  }
  func.func @transform_5(%arg0: i32, %arg1: i32) -> (i32, i32, i32) {
    %c0_i32 = arith.constant 0 : i32
    %c0_i32_0 = arith.constant 0 : i32
    %c0_i32_1 = arith.constant 0 : i32
    return %c0_i32, %arg0, %c0_i32_0 : i32, i32, i32
  }
}

</mosaic_0001>

<llo_original>
// kernel: tpu_custom_call.1
$region0: #{tpu_custom_call.1}
  #allocation0 [shape = 'u32[]', space=smem, size = 0x4, offset = 0x4, fixed_abs, tag = 'smem constant byte address 0x4 - core index']
  #allocation1 [shape = 'u32[72,128]{1,0:T(1,128)}', space=vmem, size = 0x9000, scoped, tag = 'internal scratch']
  #allocation2 [shape = 'f32[16,128]{1,0:T(8,128)}', space=vmem, size = 0x2000, scoped, tag = 'scratch operand']
  #allocation3 [shape = 'f32[16,128]{1,0:T(8,128)}', space=vmem, size = 0x2000, scoped, tag = 'scratch operand']
  #allocation4 [shape = 'f32[128,512]{1,0:T(8,128)}', space=vmem, size = 0x40000, scoped, tag = 'scratch operand']
  %s0 = inlined_call_operand.hbm [shape: bf16[8,16,128], index: 0, kind: input, shape index: {}]
  %s1 = inlined_call_operand.hbm [shape: bf16[128,512], index: 1, kind: input, shape index: {}]
  %s2 = inlined_call_operand.hbm [shape: bf16[128,512], index: 2, kind: input, shape index: {}]
  %s3 = inlined_call_operand.hbm [shape: f32[1,512], index: 3, kind: input, shape index: {}]
  %s4 = inlined_call_operand.hbm [shape: f32[8,16,128], index: 4, kind: output, shape index: {0}]
  %s5 = inlined_call_operand.hbm [shape: f32[1,16,128], index: 5, kind: output, shape index: {1}]
  %6 = xla_tuple %s4, %s5
  %s7 = sld [smem:[#allocation0]]
  $region58: #{tpu_custom_call.1} parent=0
    _
  %s9 = ssub.s32 1, %s7
  %s10 = scalar_select 0, %s9, %s7
  $region1: #{tpu_custom_call.1} parent=0
    #allocation5 [shape = 'u8[32768]{0}', space=vmem, size = 0x8000, scoped, tag = 'input window, operand 0, single buffered']
    #allocation6 [shape = 's32[1]{0}', space=sflag, size = 0x4, scoped, tag = 'scoped memory for tpu_custom_call.1']
    #allocation7 [shape = 's32[1]{0}', space=sflag, size = 0x4, scoped, tag = 'scoped memory for tpu_custom_call.1']
    #allocation8 [shape = 'u8[131072]{0}', space=vmem, size = 0x20000, scoped, tag = 'input window, operand 1, single buffered']
    #allocation9 [shape = 's32[1]{0}', space=sflag, size = 0x4, scoped, tag = 'scoped memory for tpu_custom_call.1']
    #allocation10 [shape = 'u8[131072]{0}', space=vmem, size = 0x20000, scoped, tag = 'input window, operand 2, single buffered']
    #allocation11 [shape = 'u8[2048]{0}', space=vmem, size = 0x800, scoped, tag = 'input window, operand 3, single buffered']
    #allocation12 [shape = 's32[1]{0}', space=sflag, size = 0x4, scoped, tag = 'scoped memory for tpu_custom_call.1']
    #allocation13 [shape = 'u8[65536]{0}', space=vmem, size = 0x10000, scoped, tag = 'output window, operand 0, single buffered']
    #allocation14 [shape = 'u8[8192]{0}', space=vmem, size = 0x2000, scoped, tag = 'output window, operand 1, single buffered']
    #allocation15 [shape = 's32[1]{0}', space=sflag, size = 0x4, scoped, tag = 'scoped memory for tpu_custom_call.1']
    %11 = vsyncpa [#allocation6], 0
    %12 = vsyncpa [#allocation9], 0
    %13 = vsyncpa [#allocation12], 0
    %14 = vsyncpa [#allocation7], 0
    %15 = vsyncpa [#allocation15], 0
    // Predicated region
    $region2: #{tpu_custom_call.1} parent=1 // pred_check
      _
    $region3: #{tpu_custom_call.1} parent=1 // pred_check_branch
      %17 = sbr.rel (0) target = $region5
    $region4: #{tpu_custom_call.1} parent=1 // pred_region
      %19 = vsyncadd [#allocation6], 0
      %s20 = sshll.u32 %s0, 4
      %s21 = int_to_ptr.hbm [resolvable:$true] %s20
      %s22 = sshll.u32 [#allocation5], 4
      %s23 = int_to_ptr.vmem [resolvable:$true] %s22
      %28 = dma.hbm_to_vmem [thread:$0]  %s21, 1024, %s23, [#allocation6], 64, 64, 4
    $region5: #{tpu_custom_call.1} parent=1 // pred_fallthru
      _
    // Predicated region
    $region6: #{tpu_custom_call.1} parent=1 // pred_check
      _
    $region7: #{tpu_custom_call.1} parent=1 // pred_check_branch
      %30 = sbr.rel (0) target = $region9
    $region8: #{tpu_custom_call.1} parent=1 // pred_region
      %32 = vsyncadd [#allocation9], 0
      %s33 = sshll.u32 %s1, 4
      %s34 = int_to_ptr.hbm [resolvable:$true] %s33
      %s35 = sshll.u32 [#allocation8], 4
      %s36 = int_to_ptr.vmem [resolvable:$true] %s35
      %41 = dma.hbm_to_vmem [thread:$0]  %s34, 4096, %s36, [#allocation9], 256, 256, 16
    $region9: #{tpu_custom_call.1} parent=1 // pred_fallthru
      _
    // Predicated region
    $region10: #{tpu_custom_call.1} parent=1 // pred_check
      _
    $region11: #{tpu_custom_call.1} parent=1 // pred_check_branch
      %43 = sbr.rel (0) target = $region13
    $region12: #{tpu_custom_call.1} parent=1 // pred_region
      %45 = vsyncadd [#allocation9], 0
      %s46 = sshll.u32 %s2, 4
      %s47 = int_to_ptr.hbm [resolvable:$true] %s46
      %s48 = sshll.u32 [#allocation10], 4
      %s49 = int_to_ptr.vmem [resolvable:$true] %s48
      %54 = dma.hbm_to_vmem [thread:$0]  %s47, 4096, %s49, [#allocation9], 256, 256, 16
    $region13: #{tpu_custom_call.1} parent=1 // pred_fallthru
      _
    // Predicated region
    $region14: #{tpu_custom_call.1} parent=1 // pred_check
      _
    $region15: #{tpu_custom_call.1} parent=1 // pred_check_branch
      %56 = sbr.rel (0) target = $region17
    $region16: #{tpu_custom_call.1} parent=1 // pred_region
      %58 = vsyncadd [#allocation12], 0
      %s60 = sshll.u32 %s3, 4
      %s61 = int_to_ptr.hbm [resolvable:$true] %s60
      %s62 = sshll.u32 [#allocation11], 4
      %s63 = int_to_ptr.vmem [resolvable:$true] %s62
      %65 = dma.hbm_to_vmem [thread:$0]  %s61, 64, %s63, [#allocation12]
    $region17: #{tpu_custom_call.1} parent=1 // pred_fallthru
      _
    // Predicated region
    $region18: #{tpu_custom_call.1} parent=1 // pred_check
      _
    $region19: #{tpu_custom_call.1} parent=1 // pred_check_branch
      %67 = sbr.rel (0) target = $region21
    $region20: #{tpu_custom_call.1} parent=1 // pred_region
      %69 = dma.done [#allocation6], 1024
    $region21: #{tpu_custom_call.1} parent=1 // pred_fallthru
      _
    // Predicated region
    $region22: #{tpu_custom_call.1} parent=1 // pred_check
      _
    $region23: #{tpu_custom_call.1} parent=1 // pred_check_branch
      %71 = sbr.rel (0) target = $region25
    $region24: #{tpu_custom_call.1} parent=1 // pred_region
      %73 = dma.done [#allocation9], 4096
    $region25: #{tpu_custom_call.1} parent=1 // pred_fallthru
      _
    // Predicated region
    $region26: #{tpu_custom_call.1} parent=1 // pred_check
      _
    $region27: #{tpu_custom_call.1} parent=1 // pred_check_branch
      %75 = sbr.rel (0) target = $region29
    $region28: #{tpu_custom_call.1} parent=1 // pred_region
      %77 = dma.done [#allocation9], 4096
    $region29: #{tpu_custom_call.1} parent=1 // pred_fallthru
      _
    // Predicated region
    $region30: #{tpu_custom_call.1} parent=1 // pred_check
      _
    $region31: #{tpu_custom_call.1} parent=1 // pred_check_branch
      %79 = sbr.rel (0) target = $region33
    $region32: #{tpu_custom_call.1} parent=1 // pred_region
      %81 = dma.done [#allocation12], 64
    $region33: #{tpu_custom_call.1} parent=1 // pred_fallthru
      _
    %p82 = scmp.eq.s32.totalorder 0, 0
    // Predicated region
    $region34: #{tpu_custom_call.1} parent=1 // pred_check
      %p83 = pneg %p82
    $region35: #{tpu_custom_call.1} parent=1 // pred_check_branch
      %85 = sbr.rel (%p83) target = $region37
    $region36: #{tpu_custom_call.1} parent=1 // pred_region
      %86 = vst [vmem:[#allocation2] sm:$0xff] 0.0
      %87 = vst [vmem:[#allocation2 + $0x8] sm:$0xff] 0.0
      %88 = vst [vmem:[#allocation3] sm:$0xff] 0.0
      %89 = vst [vmem:[#allocation3 + $0x8] sm:$0xff] 0.0
    $region37: #{tpu_custom_call.1} parent=1 // pred_fallthru
      _
    %v90 = vld [vmem:[#allocation5] sm:$0xf]
    %v91 = vld [vmem:[#allocation5 + $0x4] sm:$0xf]
    %v92 = vld [vmem:[#allocation5 + $0x8] sm:$0xf]
    %v93 = vld [vmem:[#allocation5 + $0xc] sm:$0xf]
    %v94 = vld [vmem:[#allocation5 + $0x10] sm:$0xf]
    %v95 = vld [vmem:[#allocation5 + $0x14] sm:$0xf]
    %v96 = vld [vmem:[#allocation5 + $0x18] sm:$0xf]
    %v97 = vld [vmem:[#allocation5 + $0x1c] sm:$0xf]
    %v98 = vld [vmem:[#allocation5 + $0x20] sm:$0xf]
    %v99 = vld [vmem:[#allocation5 + $0x24] sm:$0xf]
    %v100 = vld [vmem:[#allocation5 + $0x28] sm:$0xf]
    %v101 = vld [vmem:[#allocation5 + $0x2c] sm:$0xf]
    %v102 = vld [vmem:[#allocation5 + $0x30] sm:$0xf]
    %v103 = vld [vmem:[#allocation5 + $0x34] sm:$0xf]
    %v104 = vld [vmem:[#allocation5 + $0x38] sm:$0xf]
    %v105 = vld [vmem:[#allocation5 + $0x3c] sm:$0xf]
    %v106 = vld [vmem:[#allocation8] sm:$0xff]
    %v107 = vld [vmem:[#allocation8 + $0x8] sm:$0xff]
    %v108 = vld [vmem:[#allocation8 + $0x10] sm:$0xff]
    %v109 = vld [vmem:[#allocation8 + $0x18] sm:$0xff]
    %v110 = vld [vmem:[#allocation8 + $0x20] sm:$0xff]
    %v111 = vld [vmem:[#allocation8 + $0x28] sm:$0xff]
    %v112 = vld [vmem:[#allocation8 + $0x30] sm:$0xff]
    %v113 = vld [vmem:[#allocation8 + $0x38] sm:$0xff]
    %v114 = vld [vmem:[#allocation8 + $0x40] sm:$0xff]
    %v115 = vld [vmem:[#allocation8 + $0x48] sm:$0xff]
    %v116 = vld [vmem:[#allocation8 + $0x50] sm:$0xff]
    %v117 = vld [vmem:[#allocation8 + $0x58] sm:$0xff]
    %v118 = vld [vmem:[#allocation8 + $0x60] sm:$0xff]
    %v119 = vld [vmem:[#allocation8 + $0x68] sm:$0xff]
    %v120 = vld [vmem:[#allocation8 + $0x70] sm:$0xff]
    %v121 = vld [vmem:[#allocation8 + $0x78] sm:$0xff]
    %v122 = vld [vmem:[#allocation8 + $0x80] sm:$0xff]
    %v123 = vld [vmem:[#allocation8 + $0x88] sm:$0xff]
    %v124 = vld [vmem:[#allocation8 + $0x90] sm:$0xff]
    %v125 = vld [vmem:[#allocation8 + $0x98] sm:$0xff]
    %v126 = vld [vmem:[#allocation8 + $0xa0] sm:$0xff]
    %v127 = vld [vmem:[#allocation8 + $0xa8] sm:$0xff]
    %v128 = vld [vmem:[#allocation8 + $0xb0] sm:$0xff]
    %v129 = vld [vmem:[#allocation8 + $0xb8] sm:$0xff]
    %v130 = vld [vmem:[#allocation8 + $0xc0] sm:$0xff]
    %v131 = vld [vmem:[#allocation8 + $0xc8] sm:$0xff]
    %v132 = vld [vmem:[#allocation8 + $0xd0] sm:$0xff]
    %v133 = vld [vmem:[#allocation8 + $0xd8] sm:$0xff]
    %v134 = vld [vmem:[#allocation8 + $0xe0] sm:$0xff]
    %v135 = vld [vmem:[#allocation8 + $0xe8] sm:$0xff]
    %v136 = vld [vmem:[#allocation8 + $0xf0] sm:$0xff]
    %v137 = vld [vmem:[#allocation8 + $0xf8] sm:$0xff]
    %v138 = vld [vmem:[#allocation11] sm:$0xf]
    %v140 = vperm.slane %v138, 0
    %v141 = vperm.slane %v138, 1
    %v142 = vperm.slane %v138, 2
    %v143 = vperm.slane %v138, 3
    %v164 = vunpack.c.l.b16 %v90
    %v165 = vunpack.c.l.b16 %v91
    %v166 = vunpack.c.l.b16 %v92
    %v167 = vunpack.c.l.b16 %v93
    %v168 = vunpack.c.l.b16 %v94
    %v169 = vunpack.c.l.b16 %v95
    %v170 = vunpack.c.l.b16 %v96
    %v171 = vunpack.c.l.b16 %v97
    %v172 = vunpack.c.l.b16 %v98
    %v173 = vunpack.c.l.b16 %v99
    %v174 = vunpack.c.l.b16 %v100
    %v175 = vunpack.c.l.b16 %v101
    %v176 = vunpack.c.l.b16 %v102
    %v177 = vunpack.c.l.b16 %v103
    %v178 = vunpack.c.l.b16 %v104
    %v179 = vunpack.c.l.b16 %v105
    %v180 = vpack.c.b16 %v165, %v164
    %v181 = vpack.c.b16 %v167, %v166
    %v182 = vpack.c.b16 %v169, %v168
    %v183 = vpack.c.b16 %v171, %v170
    %v184 = vpack.c.b16 %v173, %v172
    %v185 = vpack.c.b16 %v175, %v174
    %v186 = vpack.c.b16 %v177, %v176
    %v187 = vpack.c.b16 %v179, %v178
    %v228 = vunpack.c.l.b16 %v106
    %v229 = vunpack.c.h.b16 %v106
    %v230 = vunpack.c.l.b16 %v107
    %v231 = vunpack.c.h.b16 %v107
    %v232 = vunpack.c.l.b16 %v108
    %v233 = vunpack.c.h.b16 %v108
    %v234 = vunpack.c.l.b16 %v109
    %v235 = vunpack.c.h.b16 %v109
    %v236 = vunpack.c.l.b16 %v110
    %v237 = vunpack.c.h.b16 %v110
    %v238 = vunpack.c.l.b16 %v111
    %v239 = vunpack.c.h.b16 %v111
    %v240 = vunpack.c.l.b16 %v112
    %v241 = vunpack.c.h.b16 %v112
    %v242 = vunpack.c.l.b16 %v113
    %v243 = vunpack.c.h.b16 %v113
    %v244 = vunpack.c.l.b16 %v114
    %v245 = vunpack.c.h.b16 %v114
    %v246 = vunpack.c.l.b16 %v115
    %v247 = vunpack.c.h.b16 %v115
    %v248 = vunpack.c.l.b16 %v116
    %v249 = vunpack.c.h.b16 %v116
    %v250 = vunpack.c.l.b16 %v117
    %v251 = vunpack.c.h.b16 %v117
    %v252 = vunpack.c.l.b16 %v118
    %v253 = vunpack.c.h.b16 %v118
    %v254 = vunpack.c.l.b16 %v119
    %v255 = vunpack.c.h.b16 %v119
    %v256 = vunpack.c.l.b16 %v120
    %v257 = vunpack.c.h.b16 %v120
    %v258 = vunpack.c.l.b16 %v121
    %v259 = vunpack.c.h.b16 %v121
    %v260 = vunpack.c.l.b16 %v122
    %v261 = vunpack.c.h.b16 %v122
    %v262 = vunpack.c.l.b16 %v123
    %v263 = vunpack.c.h.b16 %v123
    %v264 = vunpack.c.l.b16 %v124
    %v265 = vunpack.c.h.b16 %v124
    %v266 = vunpack.c.l.b16 %v125
    %v267 = vunpack.c.h.b16 %v125
    %v268 = vunpack.c.l.b16 %v126
    %v269 = vunpack.c.h.b16 %v126
    %v270 = vunpack.c.l.b16 %v127
    %v271 = vunpack.c.h.b16 %v127
    %v272 = vunpack.c.l.b16 %v128
    %v273 = vunpack.c.h.b16 %v128
    %v274 = vunpack.c.l.b16 %v129
    %v275 = vunpack.c.h.b16 %v129
    %v276 = vunpack.c.l.b16 %v130
    %v277 = vunpack.c.h.b16 %v130
    %v278 = vunpack.c.l.b16 %v131
    %v279 = vunpack.c.h.b16 %v131
    %v280 = vunpack.c.l.b16 %v132
    %v281 = vunpack.c.h.b16 %v132
    %v282 = vunpack.c.l.b16 %v133
    %v283 = vunpack.c.h.b16 %v133
    %v284 = vunpack.c.l.b16 %v134
    %v285 = vunpack.c.h.b16 %v134
    %v286 = vunpack.c.l.b16 %v135
    %v287 = vunpack.c.h.b16 %v135
    %v288 = vunpack.c.l.b16 %v136
    %v289 = vunpack.c.h.b16 %v136
    %v290 = vunpack.c.l.b16 %v137
    %v291 = vunpack.c.h.b16 %v137
    %v292 = vpack.c.b16 %v232, %v228
    %v293 = vpack.c.b16 %v233, %v229
    %v294 = vpack.c.b16 %v234, %v230
    %v295 = vpack.c.b16 %v235, %v231
    %v296 = vpack.c.b16 %v240, %v236
    %v297 = vpack.c.b16 %v241, %v237
    %v298 = vpack.c.b16 %v242, %v238
    %v299 = vpack.c.b16 %v243, %v239
    %v300 = vpack.c.b16 %v248, %v244
    %v301 = vpack.c.b16 %v249, %v245
    %v302 = vpack.c.b16 %v250, %v246
    %v303 = vpack.c.b16 %v251, %v247
    %v304 = vpack.c.b16 %v256, %v252
    %v305 = vpack.c.b16 %v257, %v253
    %v306 = vpack.c.b16 %v258, %v254
    %v307 = vpack.c.b16 %v259, %v255
    %v308 = vpack.c.b16 %v264, %v260
    %v309 = vpack.c.b16 %v265, %v261
    %v310 = vpack.c.b16 %v266, %v262
    %v311 = vpack.c.b16 %v267, %v263
    %v312 = vpack.c.b16 %v272, %v268
    %v313 = vpack.c.b16 %v273, %v269
    %v314 = vpack.c.b16 %v274, %v270
    %v315 = vpack.c.b16 %v275, %v271
    %v316 = vpack.c.b16 %v280, %v276
    %v317 = vpack.c.b16 %v281, %v277
    %v318 = vpack.c.b16 %v282, %v278
    %v319 = vpack.c.b16 %v283, %v279
    %v320 = vpack.c.b16 %v288, %v284
    %v321 = vpack.c.b16 %v289, %v285
    %v322 = vpack.c.b16 %v290, %v286
    %v323 = vpack.c.b16 %v291, %v287
    %356 = vmatpush.bf16.msra.mxu0 %v320
    %357 = vmatpush.bf16.msra.mxu0 %v316
    %358 = vmatpush.bf16.msra.mxu0 %v312
    %359 = vmatpush.bf16.msra.mxu0 %v308
    %360 = vmatpush.bf16.msra.mxu0 %v304
    %361 = vmatpush.bf16.msra.mxu0 %v300
    %362 = vmatpush.bf16.msra.mxu0 %v296
    %363 = vmatpush.bf16.msra.mxu0 %v292
    %364 = vmatmul.bf16.gmra.mxu0 %v180
    %v365 = vpop.f32.mrf.mxu0
    %v366 = vadd.f32 %v140, %v365
    %v367 = vpop.f32.mrf.mxu0
    %v368 = vadd.f32 %v140, %v367
    %369 = vmatmul.bf16.gmra.mxu0 %v181
    %v370 = vpop.f32.mrf.mxu0
    %v371 = vadd.f32 %v140, %v370
    %v372 = vpop.f32.mrf.mxu0
    %v373 = vadd.f32 %v140, %v372
    %374 = vmatmul.bf16.gmra.mxu0 %v182
    %v375 = vpop.f32.mrf.mxu0
    %v376 = vadd.f32 %v140, %v375
    %v377 = vpop.f32.mrf.mxu0
    %v378 = vadd.f32 %v140, %v377
    %379 = vmatmul.bf16.gmra.mxu0 %v183
    %v380 = vpop.f32.mrf.mxu0
    %v381 = vadd.f32 %v140, %v380
    %v382 = vpop.f32.mrf.mxu0
    %v383 = vadd.f32 %v140, %v382
    %384 = vmatmul.bf16.gmra.mxu0 %v184
    %v385 = vpop.f32.mrf.mxu0
    %v386 = vadd.f32 %v140, %v385
    %v387 = vpop.f32.mrf.mxu0
    %v388 = vadd.f32 %v140, %v387
    %389 = vmatmul.bf16.gmra.mxu0 %v185
    %v390 = vpop.f32.mrf.mxu0
    %v391 = vadd.f32 %v140, %v390
    %v392 = vpop.f32.mrf.mxu0
    %v393 = vadd.f32 %v140, %v392
    %394 = vmatmul.bf16.gmra.mxu0 %v186
    %v395 = vpop.f32.mrf.mxu0
    %v396 = vadd.f32 %v140, %v395
    %v397 = vpop.f32.mrf.mxu0
    %v398 = vadd.f32 %v140, %v397
    %399 = vmatmul.bf16.gmra.mxu0 %v187
    %v400 = vpop.f32.mrf.mxu0
    %v401 = vadd.f32 %v140, %v400
    %v402 = vpop.f32.mrf.mxu0
    %v403 = vadd.f32 %v140, %v402
    %404 = vdwg.mxu0
    %405 = vmatpush.bf16.msra.mxu0 %v321
    %406 = vmatpush.bf16.msra.mxu0 %v317
    %407 = vmatpush.bf16.msra.mxu0 %v313
    %408 = vmatpush.bf16.msra.mxu0 %v309
    %409 = vmatpush.bf16.msra.mxu0 %v305
    %410 = vmatpush.bf16.msra.mxu0 %v301
    %411 = vmatpush.bf16.msra.mxu0 %v297
    %412 = vmatpush.bf16.msra.mxu0 %v293
    %413 = vmatmul.bf16.gmra.mxu0 %v180
    %v414 = vpop.f32.mrf.mxu0
    %v415 = vadd.f32 %v141, %v414
    %v416 = vpop.f32.mrf.mxu0
    %v417 = vadd.f32 %v141, %v416
    %418 = vmatmul.bf16.gmra.mxu0 %v181
    %v419 = vpop.f32.mrf.mxu0
    %v420 = vadd.f32 %v141, %v419
    %v421 = vpop.f32.mrf.mxu0
    %v422 = vadd.f32 %v141, %v421
    %423 = vmatmul.bf16.gmra.mxu0 %v182
    %v424 = vpop.f32.mrf.mxu0
    %v425 = vadd.f32 %v141, %v424
    %v426 = vpop.f32.mrf.mxu0
    %v427 = vadd.f32 %v141, %v426
    %428 = vmatmul.bf16.gmra.mxu0 %v183
    %v429 = vpop.f32.mrf.mxu0
    %v430 = vadd.f32 %v141, %v429
    %v431 = vpop.f32.mrf.mxu0
    %v432 = vadd.f32 %v141, %v431
    %433 = vmatmul.bf16.gmra.mxu0 %v184
    %v434 = vpop.f32.mrf.mxu0
    %v435 = vadd.f32 %v141, %v434
    %v436 = vpop.f32.mrf.mxu0
    %v437 = vadd.f32 %v141, %v436
    %438 = vmatmul.bf16.gmra.mxu0 %v185
    %v439 = vpop.f32.mrf.mxu0
    %v440 = vadd.f32 %v141, %v439
    %v441 = vpop.f32.mrf.mxu0
    %v442 = vadd.f32 %v141, %v441
    %443 = vmatmul.bf16.gmra.mxu0 %v186
    %v444 = vpop.f32.mrf.mxu0
    %v445 = vadd.f32 %v141, %v444
    %v446 = vpop.f32.mrf.mxu0
    %v447 = vadd.f32 %v141, %v446
    %448 = vmatmul.bf16.gmra.mxu0 %v187
    %v449 = vpop.f32.mrf.mxu0
    %v450 = vadd.f32 %v141, %v449
    %v451 = vpop.f32.mrf.mxu0
    %v452 = vadd.f32 %v141, %v451
    %453 = vdwg.mxu0
    %454 = vmatpush.bf16.msra.mxu0 %v322
    %455 = vmatpush.bf16.msra.mxu0 %v318
    %456 = vmatpush.bf16.msra.mxu0 %v314
    %457 = vmatpush.bf16.msra.mxu0 %v310
    %458 = vmatpush.bf16.msra.mxu0 %v306
    %459 = vmatpush.bf16.msra.mxu0 %v302
    %460 = vmatpush.bf16.msra.mxu0 %v298
    %461 = vmatpush.bf16.msra.mxu0 %v294
    %462 = vmatmul.bf16.gmra.mxu0 %v180
    %v463 = vpop.f32.mrf.mxu0
    %v464 = vadd.f32 %v142, %v463
    %v465 = vpop.f32.mrf.mxu0
    %v466 = vadd.f32 %v142, %v465
    %467 = vmatmul.bf16.gmra.mxu0 %v181
    %v468 = vpop.f32.mrf.mxu0
    %v469 = vadd.f32 %v142, %v468
    %v470 = vpop.f32.mrf.mxu0
    %v471 = vadd.f32 %v142, %v470
    %472 = vmatmul.bf16.gmra.mxu0 %v182
    %v473 = vpop.f32.mrf.mxu0
    %v474 = vadd.f32 %v142, %v473
    %v475 = vpop.f32.mrf.mxu0
    %v476 = vadd.f32 %v142, %v475
    %477 = vmatmul.bf16.gmra.mxu0 %v183
    %v478 = vpop.f32.mrf.mxu0
    %v479 = vadd.f32 %v142, %v478
    %v480 = vpop.f32.mrf.mxu0
    %v481 = vadd.f32 %v142, %v480
    %482 = vmatmul.bf16.gmra.mxu0 %v184
    %v483 = vpop.f32.mrf.mxu0
    %v484 = vadd.f32 %v142, %v483
    %v485 = vpop.f32.mrf.mxu0
    %v486 = vadd.f32 %v142, %v485
    %487 = vmatmul.bf16.gmra.mxu0 %v185
    %v488 = vpop.f32.mrf.mxu0
    %v489 = vadd.f32 %v142, %v488
    %v490 = vpop.f32.mrf.mxu0
    %v491 = vadd.f32 %v142, %v490
    %492 = vmatmul.bf16.gmra.mxu0 %v186
    %v493 = vpop.f32.mrf.mxu0
    %v494 = vadd.f32 %v142, %v493
    %v495 = vpop.f32.mrf.mxu0
    %v496 = vadd.f32 %v142, %v495
    %497 = vmatmul.bf16.gmra.mxu0 %v187
    %v498 = vpop.f32.mrf.mxu0
    %v499 = vadd.f32 %v142, %v498
    %v500 = vpop.f32.mrf.mxu0
    %v501 = vadd.f32 %v142, %v500
    %502 = vdwg.mxu0
    %503 = vmatpush.bf16.msra.mxu0 %v323
    %504 = vmatpush.bf16.msra.mxu0 %v319
    %505 = vmatpush.bf16.msra.mxu0 %v315
    %506 = vmatpush.bf16.msra.mxu0 %v311
    %507 = vmatpush.bf16.msra.mxu0 %v307
    %508 = vmatpush.bf16.msra.mxu0 %v303
    %509 = vmatpush.bf16.msra.mxu0 %v299
    %510 = vmatpush.bf16.msra.mxu0 %v295
    %511 = vmatmul.bf16.gmra.mxu0 %v180
    %v512 = vpop.f32.mrf.mxu0
    %v513 = vadd.f32 %v143, %v512
    %v514 = vpop.f32.mrf.mxu0
    %v515 = vadd.f32 %v143, %v514
    %516 = vmatmul.bf16.gmra.mxu0 %v181
    %v517 = vpop.f32.mrf.mxu0
    %v518 = vadd.f32 %v143, %v517
    %v519 = vpop.f32.mrf.mxu0
    %v520 = vadd.f32 %v143, %v519
    %521 = vmatmul.bf16.gmra.mxu0 %v182
    %v522 = vpop.f32.mrf.mxu0
    %v523 = vadd.f32 %v143, %v522
    %v524 = vpop.f32.mrf.mxu0
    %v525 = vadd.f32 %v143, %v524
    %526 = vmatmul.bf16.gmra.mxu0 %v183
    %v527 = vpop.f32.mrf.mxu0
    %v528 = vadd.f32 %v143, %v527
    %v529 = vpop.f32.mrf.mxu0
    %v530 = vadd.f32 %v143, %v529
    %531 = vmatmul.bf16.gmra.mxu0 %v184
    %v532 = vpop.f32.mrf.mxu0
    %v533 = vadd.f32 %v143, %v532
    %v534 = vpop.f32.mrf.mxu0
    %v535 = vadd.f32 %v143, %v534
    %536 = vmatmul.bf16.gmra.mxu0 %v185
    %v537 = vpop.f32.mrf.mxu0
    %v538 = vadd.f32 %v143, %v537
    %v539 = vpop.f32.mrf.mxu0
    %v540 = vadd.f32 %v143, %v539
    %541 = vmatmul.bf16.gmra.mxu0 %v186
    %v542 = vpop.f32.mrf.mxu0
    %v543 = vadd.f32 %v143, %v542
    %v544 = vpop.f32.mrf.mxu0
    %v545 = vadd.f32 %v143, %v544
    %546 = vmatmul.bf16.gmra.mxu0 %v187
    %v547 = vpop.f32.mrf.mxu0
    %v548 = vadd.f32 %v143, %v547
    %v549 = vpop.f32.mrf.mxu0
    %v550 = vadd.f32 %v143, %v549
    %551 = vdwg.mxu0
    %552 = vst [vmem:[#allocation4] sm:$0xff] %v366
    %553 = vst [vmem:[#allocation4 + $0x8] sm:$0xff] %v415
    %554 = vst [vmem:[#allocation4 + $0x10] sm:$0xff] %v464
    %555 = vst [vmem:[#allocation4 + $0x18] sm:$0xff] %v513
    %556 = vst [vmem:[#allocation4 + $0x20] sm:$0xff] %v368
    %557 = vst [vmem:[#allocation4 + $0x28] sm:$0xff] %v417
    %558 = vst [vmem:[#allocation4 + $0x30] sm:$0xff] %v466
    %559 = vst [vmem:[#allocation4 + $0x38] sm:$0xff] %v515
    %560 = vst [vmem:[#allocation4 + $0x40] sm:$0xff] %v371
    %561 = vst [vmem:[#allocation4 + $0x48] sm:$0xff] %v420
    %562 = vst [vmem:[#allocation4 + $0x50] sm:$0xff] %v469
    %563 = vst [vmem:[#allocation4 + $0x58] sm:$0xff] %v518
    %564 = vst [vmem:[#allocation4 + $0x60] sm:$0xff] %v373
    %565 = vst [vmem:[#allocation4 + $0x68] sm:$0xff] %v422
    %566 = vst [vmem:[#allocation4 + $0x70] sm:$0xff] %v471
    %567 = vst [vmem:[#allocation4 + $0x78] sm:$0xff] %v520
    %568 = vst [vmem:[#allocation4 + $0x80] sm:$0xff] %v376
    %569 = vst [vmem:[#allocation4 + $0x88] sm:$0xff] %v425
    %570 = vst [vmem:[#allocation4 + $0x90] sm:$0xff] %v474
    %571 = vst [vmem:[#allocation4 + $0x98] sm:$0xff] %v523
    %572 = vst [vmem:[#allocation4 + $0xa0] sm:$0xff] %v378
    %573 = vst [vmem:[#allocation4 + $0xa8] sm:$0xff] %v427
    %574 = vst [vmem:[#allocation4 + $0xb0] sm:$0xff] %v476
    %575 = vst [vmem:[#allocation4 + $0xb8] sm:$0xff] %v525
    %576 = vst [vmem:[#allocation4 + $0xc0] sm:$0xff] %v381
    %577 = vst [vmem:[#allocation4 + $0xc8] sm:$0xff] %v430
    %578 = vst [vmem:[#allocation4 + $0xd0] sm:$0xff] %v479
    %579 = vst [vmem:[#allocation4 + $0xd8] sm:$0xff] %v528
    %580 = vst [vmem:[#allocation4 + $0xe0] sm:$0xff] %v383
    %581 = vst [vmem:[#allocation4 + $0xe8] sm:$0xff] %v432
    %582 = vst [vmem:[#allocation4 + $0xf0] sm:$0xff] %v481
    %583 = vst [vmem:[#allocation4 + $0xf8] sm:$0xff] %v530
    %584 = vst [vmem:[#allocation4 + $0x100] sm:$0xff] %v386
    %585 = vst [vmem:[#allocation4 + $0x108] sm:$0xff] %v435
    %586 = vst [vmem:[#allocation4 + $0x110] sm:$0xff] %v484
    %587 = vst [vmem:[#allocation4 + $0x118] sm:$0xff] %v533
    %588 = vst [vmem:[#allocation4 + $0x120] sm:$0xff] %v388
    %589 = vst [vmem:[#allocation4 + $0x128] sm:$0xff] %v437
    %590 = vst [vmem:[#allocation4 + $0x130] sm:$0xff] %v486
    %591 = vst [vmem:[#allocation4 + $0x138] sm:$0xff] %v535
    %592 = vst [vmem:[#allocation4 + $0x140] sm:$0xff] %v391
    %593 = vst [vmem:[#allocation4 + $0x148] sm:$0xff] %v440
    %594 = vst [vmem:[#allocation4 + $0x150] sm:$0xff] %v489
    %595 = vst [vmem:[#allocation4 + $0x158] sm:$0xff] %v538
    %596 = vst [vmem:[#allocation4 + $0x160] sm:$0xff] %v393
    %597 = vst [vmem:[#allocation4 + $0x168] sm:$0xff] %v442
    %598 = vst [vmem:[#allocation4 + $0x170] sm:$0xff] %v491
    %599 = vst [vmem:[#allocation4 + $0x178] sm:$0xff] %v540
    %600 = vst [vmem:[#allocation4 + $0x180] sm:$0xff] %v396
    %601 = vst [vmem:[#allocation4 + $0x188] sm:$0xff] %v445
    %602 = vst [vmem:[#allocation4 + $0x190] sm:$0xff] %v494
    %603 = vst [vmem:[#allocation4 + $0x198] sm:$0xff] %v543
    %604 = vst [vmem:[#allocation4 + $0x1a0] sm:$0xff] %v398
    %605 = vst [vmem:[#allocation4 + $0x1a8] sm:$0xff] %v447
    %606 = vst [vmem:[#allocation4 + $0x1b0] sm:$0xff] %v496
    %607 = vst [vmem:[#allocation4 + $0x1b8] sm:$0xff] %v545
    %608 = vst [vmem:[#allocation4 + $0x1c0] sm:$0xff] %v401
    %609 = vst [vmem:[#allocation4 + $0x1c8] sm:$0xff] %v450
    %610 = vst [vmem:[#allocation4 + $0x1d0] sm:$0xff] %v499
    %611 = vst [vmem:[#allocation4 + $0x1d8] sm:$0xff] %v548
    %612 = vst [vmem:[#allocation4 + $0x1e0] sm:$0xff] %v403
    %613 = vst [vmem:[#allocation4 + $0x1e8] sm:$0xff] %v452
    %614 = vst [vmem:[#allocation4 + $0x1f0] sm:$0xff] %v501
    %615 = vst [vmem:[#allocation4 + $0x1f8] sm:$0xff] %v550
    %v616 = vld [vmem:[#allocation10] sm:$0xff]
    %v617 = vld [vmem:[#allocation10 + $0x8] sm:$0xff]
    %v618 = vld [vmem:[#allocation10 + $0x10] sm:$0xff]
    %v619 = vld [vmem:[#allocation10 + $0x18] sm:$0xff]
    %v620 = vld [vmem:[#allocation10 + $0x20] sm:$0xff]
    %v621 = vld [vmem:[#allocation10 + $0x28] sm:$0xff]
    %v622 = vld [vmem:[#allocation10 + $0x30] sm:$0xff]
    %v623 = vld [vmem:[#allocation10 + $0x38] sm:$0xff]
    %v624 = vld [vmem:[#allocation10 + $0x40] sm:$0xff]
    %v625 = vld [vmem:[#allocation10 + $0x48] sm:$0xff]
    %v626 = vld [vmem:[#allocation10 + $0x50] sm:$0xff]
    %v627 = vld [vmem:[#allocation10 + $0x58] sm:$0xff]
    %v628 = vld [vmem:[#allocation10 + $0x60] sm:$0xff]
    %v629 = vld [vmem:[#allocation10 + $0x68] sm:$0xff]
    %v630 = vld [vmem:[#allocation10 + $0x70] sm:$0xff]
    %v631 = vld [vmem:[#allocation10 + $0x78] sm:$0xff]
    %v632 = vld [vmem:[#allocation10 + $0x80] sm:$0xff]
    %v633 = vld [vmem:[#allocation10 + $0x88] sm:$0xff]
    %v634 = vld [vmem:[#allocation10 + $0x90] sm:$0xff]
    %v635 = vld [vmem:[#allocation10 + $0x98] sm:$0xff]
    %v636 = vld [vmem:[#allocation10 + $0xa0] sm:$0xff]
    %v637 = vld [vmem:[#allocation10 + $0xa8] sm:$0xff]
    %v638 = vld [vmem:[#allocation10 + $0xb0] sm:$0xff]
    %v639 = vld [vmem:[#allocation10 + $0xb8] sm:$0xff]
    %v640 = vld [vmem:[#allocation10 + $0xc0] sm:$0xff]
    %v641 = vld [vmem:[#allocation10 + $0xc8] sm:$0xff]
    %v642 = vld [vmem:[#allocation10 + $0xd0] sm:$0xff]
    %v643 = vld [vmem:[#allocation10 + $0xd8] sm:$0xff]
    %v644 = vld [vmem:[#allocation10 + $0xe0] sm:$0xff]
    %v645 = vld [vmem:[#allocation10 + $0xe8] sm:$0xff]
    %v646 = vld [vmem:[#allocation10 + $0xf0] sm:$0xff]
    %v647 = vld [vmem:[#allocation10 + $0xf8] sm:$0xff]
    %v648 = vld [vmem:[#allocation2] sm:$0xff]
    %v649 = vld [vmem:[#allocation2 + $0x8] sm:$0xff]
    %v650 = vld [vmem:[#allocation3] sm:$0xff]
    %v651 = vld [vmem:[#allocation3 + $0x8] sm:$0xff]
    %s652 = smul.u32 0, 4
    %s653 = smul.addr %s652, 8
    %s654 = scalar_lea.vmem [#allocation4], %s653
    %v655 = vld [vmem:[%s654] sm:$0xff]
    %v656 = vld [vmem:[%s654 + $0x8] sm:$0xff]
    %v657 = vld [vmem:[%s654 + $0x10] sm:$0xff]
    %v658 = vld [vmem:[%s654 + $0x18] sm:$0xff]
    %v659 = vld [vmem:[%s654 + $0x20] sm:$0xff]
    %v660 = vld [vmem:[%s654 + $0x28] sm:$0xff]
    %v661 = vld [vmem:[%s654 + $0x30] sm:$0xff]
    %v662 = vld [vmem:[%s654 + $0x38] sm:$0xff]
    %v663 = vpack.c.bf16 %v649, %v648
    %v696 = vunpack.c.l.b16 %v616
    %v697 = vunpack.c.h.b16 %v616
    %v698 = vunpack.c.l.b16 %v617
    %v699 = vunpack.c.h.b16 %v617
    %v700 = vunpack.c.l.b16 %v618
    %v701 = vunpack.c.h.b16 %v618
    %v702 = vunpack.c.l.b16 %v619
    %v703 = vunpack.c.h.b16 %v619
    %v704 = vunpack.c.l.b16 %v620
    %v705 = vunpack.c.h.b16 %v620
    %v706 = vunpack.c.l.b16 %v621
    %v707 = vunpack.c.h.b16 %v621
    %v708 = vunpack.c.l.b16 %v622
    %v709 = vunpack.c.h.b16 %v622
    %v710 = vunpack.c.l.b16 %v623
    %v711 = vunpack.c.h.b16 %v623
    %v712 = vunpack.c.l.b16 %v624
    %v713 = vunpack.c.h.b16 %v624
    %v714 = vunpack.c.l.b16 %v625
    %v715 = vunpack.c.h.b16 %v625
    %v716 = vunpack.c.l.b16 %v626
    %v717 = vunpack.c.h.b16 %v626
    %v718 = vunpack.c.l.b16 %v627
    %v719 = vunpack.c.h.b16 %v627
    %v720 = vunpack.c.l.b16 %v628
    %v721 = vunpack.c.h.b16 %v628
    %v722 = vunpack.c.l.b16 %v629
    %v723 = vunpack.c.h.b16 %v629
    %v724 = vunpack.c.l.b16 %v630
    %v725 = vunpack.c.h.b16 %v630
    %v726 = vunpack.c.l.b16 %v631
    %v727 = vunpack.c.h.b16 %v631
    %v728 = vunpack.c.l.b16 %v632
    %v729 = vunpack.c.h.b16 %v632
    %v730 = vunpack.c.l.b16 %v633
    %v731 = vunpack.c.h.b16 %v633
    %v732 = vunpack.c.l.b16 %v634
    %v733 = vunpack.c.h.b16 %v634
    %v734 = vunpack.c.l.b16 %v635
    %v735 = vunpack.c.h.b16 %v635
    %v736 = vunpack.c.l.b16 %v636
    %v737 = vunpack.c.h.b16 %v636
    %v738 = vunpack.c.l.b16 %v637
    %v739 = vunpack.c.h.b16 %v637
    %v740 = vunpack.c.l.b16 %v638
    %v741 = vunpack.c.h.b16 %v638
    %v742 = vunpack.c.l.b16 %v639
    %v743 = vunpack.c.h.b16 %v639
    %v744 = vunpack.c.l.b16 %v640
    %v745 = vunpack.c.h.b16 %v640
    %v746 = vunpack.c.l.b16 %v641
    %v747 = vunpack.c.h.b16 %v641
    %v748 = vunpack.c.l.b16 %v642
    %v749 = vunpack.c.h.b16 %v642
    %v750 = vunpack.c.l.b16 %v643
    %v751 = vunpack.c.h.b16 %v643
    %v752 = vunpack.c.l.b16 %v644
    %v753 = vunpack.c.h.b16 %v644
    %v754 = vunpack.c.l.b16 %v645
    %v755 = vunpack.c.h.b16 %v645
    %v756 = vunpack.c.l.b16 %v646
    %v757 = vunpack.c.h.b16 %v646
    %v758 = vunpack.c.l.b16 %v647
    %v759 = vunpack.c.h.b16 %v647
    %v760 = vpack.c.b16 %v700, %v696
    %v761 = vpack.c.b16 %v701, %v697
    %v762 = vpack.c.b16 %v702, %v698
    %v763 = vpack.c.b16 %v703, %v699
    %v764 = vpack.c.b16 %v708, %v704
    %v765 = vpack.c.b16 %v709, %v705
    %v766 = vpack.c.b16 %v710, %v706
    %v767 = vpack.c.b16 %v711, %v707
    %v768 = vpack.c.b16 %v716, %v712
    %v769 = vpack.c.b16 %v717, %v713
    %v770 = vpack.c.b16 %v718, %v714
    %v771 = vpack.c.b16 %v719, %v715
    %v772 = vpack.c.b16 %v724, %v720
    %v773 = vpack.c.b16 %v725, %v721
    %v774 = vpack.c.b16 %v726, %v722
    %v775 = vpack.c.b16 %v727, %v723
    %v776 = vpack.c.b16 %v732, %v728
    %v777 = vpack.c.b16 %v733, %v729
    %v778 = vpack.c.b16 %v734, %v730
    %v779 = vpack.c.b16 %v735, %v731
    %v780 = vpack.c.b16 %v740, %v736
    %v781 = vpack.c.b16 %v741, %v737
    %v782 = vpack.c.b16 %v742, %v738
    %v783 = vpack.c.b16 %v743, %v739
    %v784 = vpack.c.b16 %v748, %v744
    %v785 = vpack.c.b16 %v749, %v745
    %v786 = vpack.c.b16 %v750, %v746
    %v787 = vpack.c.b16 %v751, %v747
    %v788 = vpack.c.b16 %v756, %v752
    %v789 = vpack.c.b16 %v757, %v753
    %v790 = vpack.c.b16 %v758, %v754
    %v791 = vpack.c.b16 %v759, %v755
    %824 = vmatpush.bf16.msra.mxu0 %v788
    %825 = vmatpush.bf16.msra.mxu0 %v784
    %826 = vmatpush.bf16.msra.mxu0 %v780
    %827 = vmatpush.bf16.msra.mxu0 %v776
    %828 = vmatpush.bf16.msra.mxu0 %v772
    %829 = vmatpush.bf16.msra.mxu0 %v768
    %830 = vmatpush.bf16.msra.mxu0 %v764
    %831 = vmatpush.bf16.msra.mxu0 %v760
    %832 = vmatmul.bf16.gmra.mxu0 %v663
    %v833 = vpop.f32.mrf.mxu0
    %v834 = vadd.f32 0.0, %v833
    %v835 = vpop.f32.mrf.mxu0
    %v836 = vadd.f32 0.0, %v835
    %837 = vdwg.mxu0
    %838 = vmatpush.bf16.msra.mxu0 %v789
    %839 = vmatpush.bf16.msra.mxu0 %v785
    %840 = vmatpush.bf16.msra.mxu0 %v781
    %841 = vmatpush.bf16.msra.mxu0 %v777
    %842 = vmatpush.bf16.msra.mxu0 %v773
    %843 = vmatpush.bf16.msra.mxu0 %v769
    %844 = vmatpush.bf16.msra.mxu0 %v765
    %845 = vmatpush.bf16.msra.mxu0 %v761
    %846 = vmatmul.bf16.gmra.mxu0 %v663
    %v847 = vpop.f32.mrf.mxu0
    %v848 = vadd.f32 0.0, %v847
    %v849 = vpop.f32.mrf.mxu0
    %v850 = vadd.f32 0.0, %v849
    %851 = vdwg.mxu0
    %852 = vmatpush.bf16.msra.mxu0 %v790
    %853 = vmatpush.bf16.msra.mxu0 %v786
    %854 = vmatpush.bf16.msra.mxu0 %v782
    %855 = vmatpush.bf16.msra.mxu0 %v778
    %856 = vmatpush.bf16.msra.mxu0 %v774
    %857 = vmatpush.bf16.msra.mxu0 %v770
    %858 = vmatpush.bf16.msra.mxu0 %v766
    %859 = vmatpush.bf16.msra.mxu0 %v762
    %860 = vmatmul.bf16.gmra.mxu0 %v663
    %v861 = vpop.f32.mrf.mxu0
    %v862 = vadd.f32 0.0, %v861
    %v863 = vpop.f32.mrf.mxu0
    %v864 = vadd.f32 0.0, %v863
    %865 = vdwg.mxu0
    %866 = vmatpush.bf16.msra.mxu0 %v791
    %867 = vmatpush.bf16.msra.mxu0 %v787
    %868 = vmatpush.bf16.msra.mxu0 %v783
    %869 = vmatpush.bf16.msra.mxu0 %v779
    %870 = vmatpush.bf16.msra.mxu0 %v775
    %871 = vmatpush.bf16.msra.mxu0 %v771
    %872 = vmatpush.bf16.msra.mxu0 %v767
    %873 = vmatpush.bf16.msra.mxu0 %v763
    %874 = vmatmul.bf16.gmra.mxu0 %v663
    %v875 = vpop.f32.mrf.mxu0
    %v876 = vadd.f32 0.0, %v875
    %v877 = vpop.f32.mrf.mxu0
    %v878 = vadd.f32 0.0, %v877
    %879 = vdwg.mxu0
    %v880 = vadd.f32 %v655, %v834
    %v881 = vadd.f32 %v656, %v848
    %v882 = vadd.f32 %v657, %v862
    %v883 = vadd.f32 %v658, %v876
    %v884 = vadd.f32 %v659, %v836
    %v885 = vadd.f32 %v660, %v850
    %v886 = vadd.f32 %v661, %v864
    %v887 = vadd.f32 %v662, %v878
    %v888 = vtanh.pop %v880
    %v889 = vtanh.pop %v884
    %v890 = vmul.f32 %v888, 0.5
    %v891 = vmul.f32 %v889, 0.5
    %v892 = vadd.f32 %v890, 0.5
    %v893 = vadd.f32 %v891, 0.5
    %v894 = vtanh.pop %v881
    %v895 = vtanh.pop %v885
    %v896 = vmul.f32 %v894, 0.5
    %v897 = vmul.f32 %v895, 0.5
    %v898 = vadd.f32 %v896, 0.5
    %v899 = vadd.f32 %v897, 0.5
    %v900 = vtanh.pop %v882
    %v901 = vtanh.pop %v886
    %v902 = vmul.f32 %v900, 0.5
    %v903 = vmul.f32 %v901, 0.5
    %v904 = vadd.f32 %v902, 0.5
    %v905 = vadd.f32 %v903, 0.5
    %v906 = vtanh.pop %v883
    %v907 = vtanh.pop %v887
    %v908 = vmul.f32 %v892, %v650
    %v909 = vmul.f32 %v893, %v651
    %v910 = vmul.f32 %v898, %v906
    %v911 = vmul.f32 %v899, %v907
    %v912 = vadd.f32 %v908, %v910
    %v913 = vadd.f32 %v909, %v911
    %v914 = vtanh.pop %v912
    %v915 = vtanh.pop %v913
    %v916 = vmul.f32 %v904, %v914
    %v917 = vmul.f32 %v905, %v915
    %918 = vst [vmem:[#allocation13] sm:$0xff] %v916
    %919 = vst [vmem:[#allocation13 + $0x8] sm:$0xff] %v917
    %s920 = smul.u32 2, 4
    %s921 = smul.addr %s920, 8
    %s922 = scalar_lea.vmem [#allocation4], %s921
    %v923 = vld [vmem:[%s922] sm:$0xff]
    %v924 = vld [vmem:[%s922 + $0x8] sm:$0xff]
    %v925 = vld [vmem:[%s922 + $0x10] sm:$0xff]
    %v926 = vld [vmem:[%s922 + $0x18] sm:$0xff]
    %v927 = vld [vmem:[%s922 + $0x20] sm:$0xff]
    %v928 = vld [vmem:[%s922 + $0x28] sm:$0xff]
    %v929 = vld [vmem:[%s922 + $0x30] sm:$0xff]
    %v930 = vld [vmem:[%s922 + $0x38] sm:$0xff]
    %v931 = vpack.c.bf16 %v917, %v916
    %932 = vmatpush.bf16.msra.mxu0 %v788
    %933 = vmatpush.bf16.msra.mxu0 %v784
    %934 = vmatpush.bf16.msra.mxu0 %v780
    %935 = vmatpush.bf16.msra.mxu0 %v776
    %936 = vmatpush.bf16.msra.mxu0 %v772
    %937 = vmatpush.bf16.msra.mxu0 %v768
    %938 = vmatpush.bf16.msra.mxu0 %v764
    %939 = vmatpush.bf16.msra.mxu0 %v760
    %940 = vmatmul.bf16.gmra.mxu0 %v931
    %v941 = vpop.f32.mrf.mxu0
    %v942 = vadd.f32 0.0, %v941
    %v943 = vpop.f32.mrf.mxu0
    %v944 = vadd.f32 0.0, %v943
    %945 = vdwg.mxu0
    %946 = vmatpush.bf16.msra.mxu0 %v789
    %947 = vmatpush.bf16.msra.mxu0 %v785
    %948 = vmatpush.bf16.msra.mxu0 %v781
    %949 = vmatpush.bf16.msra.mxu0 %v777
    %950 = vmatpush.bf16.msra.mxu0 %v773
    %951 = vmatpush.bf16.msra.mxu0 %v769
    %952 = vmatpush.bf16.msra.mxu0 %v765
    %953 = vmatpush.bf16.msra.mxu0 %v761
    %954 = vmatmul.bf16.gmra.mxu0 %v931
    %v955 = vpop.f32.mrf.mxu0
    %v956 = vadd.f32 0.0, %v955
    %v957 = vpop.f32.mrf.mxu0
    %v958 = vadd.f32 0.0, %v957
    %959 = vdwg.mxu0
    %960 = vmatpush.bf16.msra.mxu0 %v790
    %961 = vmatpush.bf16.msra.mxu0 %v786
    %962 = vmatpush.bf16.msra.mxu0 %v782
    %963 = vmatpush.bf16.msra.mxu0 %v778
    %964 = vmatpush.bf16.msra.mxu0 %v774
    %965 = vmatpush.bf16.msra.mxu0 %v770
    %966 = vmatpush.bf16.msra.mxu0 %v766
    %967 = vmatpush.bf16.msra.mxu0 %v762
    %968 = vmatmul.bf16.gmra.mxu0 %v931
    %v969 = vpop.f32.mrf.mxu0
    %v970 = vadd.f32 0.0, %v969
    %v971 = vpop.f32.mrf.mxu0
    %v972 = vadd.f32 0.0, %v971
    %973 = vdwg.mxu0
    %974 = vmatpush.bf16.msra.mxu0 %v791
    %975 = vmatpush.bf16.msra.mxu0 %v787
    %976 = vmatpush.bf16.msra.mxu0 %v783
    %977 = vmatpush.bf16.msra.mxu0 %v779
    %978 = vmatpush.bf16.msra.mxu0 %v775
    %979 = vmatpush.bf16.msra.mxu0 %v771
    %980 = vmatpush.bf16.msra.mxu0 %v767
    %981 = vmatpush.bf16.msra.mxu0 %v763
    %982 = vmatmul.bf16.gmra.mxu0 %v931
    %v983 = vpop.f32.mrf.mxu0
    %v984 = vadd.f32 0.0, %v983
    %v985 = vpop.f32.mrf.mxu0
    %v986 = vadd.f32 0.0, %v985
    %987 = vdwg.mxu0
    %v988 = vadd.f32 %v923, %v942
    %v989 = vadd.f32 %v924, %v956
    %v990 = vadd.f32 %v925, %v970
    %v991 = vadd.f32 %v926, %v984
    %v992 = vadd.f32 %v927, %v944
    %v993 = vadd.f32 %v928, %v958
    %v994 = vadd.f32 %v929, %v972
    %v995 = vadd.f32 %v930, %v986
    %v996 = vtanh.pop %v988
    %v997 = vtanh.pop %v992
    %v998 = vmul.f32 %v996, 0.5
    %v999 = vmul.f32 %v997, 0.5
    %v1000 = vadd.f32 %v998, 0.5
    %v1001 = vadd.f32 %v999, 0.5
    %v1002 = vtanh.pop %v989
    %v1003 = vtanh.pop %v993
    %v1004 = vmul.f32 %v1002, 0.5
    %v1005 = vmul.f32 %v1003, 0.5
    %v1006 = vadd.f32 %v1004, 0.5
    %v1007 = vadd.f32 %v1005, 0.5
    %v1008 = vtanh.pop %v990
    %v1009 = vtanh.pop %v994
    %v1010 = vmul.f32 %v1008, 0.5
    %v1011 = vmul.f32 %v1009, 0.5
    %v1012 = vadd.f32 %v1010, 0.5
    %v1013 = vadd.f32 %v1011, 0.5
    %v1014 = vtanh.pop %v991
    %v1015 = vtanh.pop %v995
    %v1016 = vmul.f32 %v1000, %v912
    %v1017 = vmul.f32 %v1001, %v913
    %v1018 = vmul.f32 %v1006, %v1014
    %v1019 = vmul.f32 %v1007, %v1015
    %v1020 = vadd.f32 %v1016, %v1018
    %v1021 = vadd.f32 %v1017, %v1019
    %v1022 = vtanh.pop %v1020
    %v1023 = vtanh.pop %v1021
    %v1024 = vmul.f32 %v1012, %v1022
    %v1025 = vmul.f32 %v1013, %v1023
    %s1026 = scalar_lea.vmem [#allocation13], 16
    %1027 = vst [vmem:[%s1026] sm:$0xff] %v1024
    %1028 = vst [vmem:[%s1026 + $0x8] sm:$0xff] %v1025
    %s1029 = smul.u32 4, 4
    %s1030 = smul.addr %s1029, 8
    %s1031 = scalar_lea.vmem [#allocation4], %s1030
    %v1032 = vld [vmem:[%s1031] sm:$0xff]
    %v1033 = vld [vmem:[%s1031 + $0x8] sm:$0xff]
    %v1034 = vld [vmem:[%s1031 + $0x10] sm:$0xff]
    %v1035 = vld [vmem:[%s1031 + $0x18] sm:$0xff]
    %v1036 = vld [vmem:[%s1031 + $0x20] sm:$0xff]
    %v1037 = vld [vmem:[%s1031 + $0x28] sm:$0xff]
    %v1038 = vld [vmem:[%s1031 + $0x30] sm:$0xff]
    %v1039 = vld [vmem:[%s1031 + $0x38] sm:$0xff]
    %v1040 = vpack.c.bf16 %v1025, %v1024
    %1041 = vmatpush.bf16.msra.mxu0 %v788
    %1042 = vmatpush.bf16.msra.mxu0 %v784
    %1043 = vmatpush.bf16.msra.mxu0 %v780
    %1044 = vmatpush.bf16.msra.mxu0 %v776
    %1045 = vmatpush.bf16.msra.mxu0 %v772
    %1046 = vmatpush.bf16.msra.mxu0 %v768
    %1047 = vmatpush.bf16.msra.mxu0 %v764
    %1048 = vmatpush.bf16.msra.mxu0 %v760
    %1049 = vmatmul.bf16.gmra.mxu0 %v1040
    %v1050 = vpop.f32.mrf.mxu0
    %v1051 = vadd.f32 0.0, %v1050
    %v1052 = vpop.f32.mrf.mxu0
    %v1053 = vadd.f32 0.0, %v1052
    %1054 = vdwg.mxu0
    %1055 = vmatpush.bf16.msra.mxu0 %v789
    %1056 = vmatpush.bf16.msra.mxu0 %v785
    %1057 = vmatpush.bf16.msra.mxu0 %v781
    %1058 = vmatpush.bf16.msra.mxu0 %v777
    %1059 = vmatpush.bf16.msra.mxu0 %v773
    %1060 = vmatpush.bf16.msra.mxu0 %v769
    %1061 = vmatpush.bf16.msra.mxu0 %v765
    %1062 = vmatpush.bf16.msra.mxu0 %v761
    %1063 = vmatmul.bf16.gmra.mxu0 %v1040
    %v1064 = vpop.f32.mrf.mxu0
    %v1065 = vadd.f32 0.0, %v1064
    %v1066 = vpop.f32.mrf.mxu0
    %v1067 = vadd.f32 0.0, %v1066
    %1068 = vdwg.mxu0
    %1069 = vmatpush.bf16.msra.mxu0 %v790
    %1070 = vmatpush.bf16.msra.mxu0 %v786
    %1071 = vmatpush.bf16.msra.mxu0 %v782
    %1072 = vmatpush.bf16.msra.mxu0 %v778
    %1073 = vmatpush.bf16.msra.mxu0 %v774
    %1074 = vmatpush.bf16.msra.mxu0 %v770
    %1075 = vmatpush.bf16.msra.mxu0 %v766
    %1076 = vmatpush.bf16.msra.mxu0 %v762
    %1077 = vmatmul.bf16.gmra.mxu0 %v1040
    %v1078 = vpop.f32.mrf.mxu0
    %v1079 = vadd.f32 0.0, %v1078
    %v1080 = vpop.f32.mrf.mxu0
    %v1081 = vadd.f32 0.0, %v1080
    %1082 = vdwg.mxu0
    %1083 = vmatpush.bf16.msra.mxu0 %v791
    %1084 = vmatpush.bf16.msra.mxu0 %v787
    %1085 = vmatpush.bf16.msra.mxu0 %v783
    %1086 = vmatpush.bf16.msra.mxu0 %v779
    %1087 = vmatpush.bf16.msra.mxu0 %v775
    %1088 = vmatpush.bf16.msra.mxu0 %v771
    %1089 = vmatpush.bf16.msra.mxu0 %v767
    %1090 = vmatpush.bf16.msra.mxu0 %v763
    %1091 = vmatmul.bf16.gmra.mxu0 %v1040
    %v1092 = vpop.f32.mrf.mxu0
    %v1093 = vadd.f32 0.0, %v1092
    %v1094 = vpop.f32.mrf.mxu0
    %v1095 = vadd.f32 0.0, %v1094
    %1096 = vdwg.mxu0
    %v1097 = vadd.f32 %v1032, %v1051
    %v1098 = vadd.f32 %v1033, %v1065
    %v1099 = vadd.f32 %v1034, %v1079
    %v1100 = vadd.f32 %v1035, %v1093
    %v1101 = vadd.f32 %v1036, %v1053
    %v1102 = vadd.f32 %v1037, %v1067
    %v1103 = vadd.f32 %v1038, %v1081
    %v1104 = vadd.f32 %v1039, %v1095
    %v1105 = vtanh.pop %v1097
    %v1106 = vtanh.pop %v1101
    %v1107 = vmul.f32 %v1105, 0.5
    %v1108 = vmul.f32 %v1106, 0.5
    %v1109 = vadd.f32 %v1107, 0.5
    %v1110 = vadd.f32 %v1108, 0.5
    %v1111 = vtanh.pop %v1098
    %v1112 = vtanh.pop %v1102
    %v1113 = vmul.f32 %v1111, 0.5
    %v1114 = vmul.f32 %v1112, 0.5
    %v1115 = vadd.f32 %v1113, 0.5
    %v1116 = vadd.f32 %v1114, 0.5
    %v1117 = vtanh.pop %v1099
    %v1118 = vtanh.pop %v1103
    %v1119 = vmul.f32 %v1117, 0.5
    %v1120 = vmul.f32 %v1118, 0.5
    %v1121 = vadd.f32 %v1119, 0.5
    %v1122 = vadd.f32 %v1120, 0.5
    %v1123 = vtanh.pop %v1100
    %v1124 = vtanh.pop %v1104
    %v1125 = vmul.f32 %v1109, %v1020
    %v1126 = vmul.f32 %v1110, %v1021
    %v1127 = vmul.f32 %v1115, %v1123
    %v1128 = vmul.f32 %v1116, %v1124
    %v1129 = vadd.f32 %v1125, %v1127
    %v1130 = vadd.f32 %v1126, %v1128
    %v1131 = vtanh.pop %v1129
    %v1132 = vtanh.pop %v1130
    %v1133 = vmul.f32 %v1121, %v1131
    %v1134 = vmul.f32 %v1122, %v1132
    %s1135 = scalar_lea.vmem [#allocation13], 32
    %1136 = vst [vmem:[%s1135] sm:$0xff] %v1133
    %1137 = vst [vmem:[%s1135 + $0x8] sm:$0xff] %v1134
    %s1138 = smul.u32 6, 4
    %s1139 = smul.addr %s1138, 8
    %s1140 = scalar_lea.vmem [#allocation4], %s1139
    %v1141 = vld [vmem:[%s1140] sm:$0xff]
    %v1142 = vld [vmem:[%s1140 + $0x8] sm:$0xff]
    %v1143 = vld [vmem:[%s1140 + $0x10] sm:$0xff]
    %v1144 = vld [vmem:[%s1140 + $0x18] sm:$0xff]
    %v1145 = vld [vmem:[%s1140 + $0x20] sm:$0xff]
    %v1146 = vld [vmem:[%s1140 + $0x28] sm:$0xff]
    %v1147 = vld [vmem:[%s1140 + $0x30] sm:$0xff]
    %v1148 = vld [vmem:[%s1140 + $0x38] sm:$0xff]
    %v1149 = vpack.c.bf16 %v1134, %v1133
    %1150 = vmatpush.bf16.msra.mxu0 %v788
    %1151 = vmatpush.bf16.msra.mxu0 %v784
    %1152 = vmatpush.bf16.msra.mxu0 %v780
    %1153 = vmatpush.bf16.msra.mxu0 %v776
    %1154 = vmatpush.bf16.msra.mxu0 %v772
    %1155 = vmatpush.bf16.msra.mxu0 %v768
    %1156 = vmatpush.bf16.msra.mxu0 %v764
    %1157 = vmatpush.bf16.msra.mxu0 %v760
    %1158 = vmatmul.bf16.gmra.mxu0 %v1149
    %v1159 = vpop.f32.mrf.mxu0
    %v1160 = vadd.f32 0.0, %v1159
    %v1161 = vpop.f32.mrf.mxu0
    %v1162 = vadd.f32 0.0, %v1161
    %1163 = vdwg.mxu0
    %1164 = vmatpush.bf16.msra.mxu0 %v789
    %1165 = vmatpush.bf16.msra.mxu0 %v785
    %1166 = vmatpush.bf16.msra.mxu0 %v781
    %1167 = vmatpush.bf16.msra.mxu0 %v777
    %1168 = vmatpush.bf16.msra.mxu0 %v773
    %1169 = vmatpush.bf16.msra.mxu0 %v769
    %1170 = vmatpush.bf16.msra.mxu0 %v765
    %1171 = vmatpush.bf16.msra.mxu0 %v761
    %1172 = vmatmul.bf16.gmra.mxu0 %v1149
    %v1173 = vpop.f32.mrf.mxu0
    %v1174 = vadd.f32 0.0, %v1173
    %v1175 = vpop.f32.mrf.mxu0
    %v1176 = vadd.f32 0.0, %v1175
    %1177 = vdwg.mxu0
    %1178 = vmatpush.bf16.msra.mxu0 %v790
    %1179 = vmatpush.bf16.msra.mxu0 %v786
    %1180 = vmatpush.bf16.msra.mxu0 %v782
    %1181 = vmatpush.bf16.msra.mxu0 %v778
    %1182 = vmatpush.bf16.msra.mxu0 %v774
    %1183 = vmatpush.bf16.msra.mxu0 %v770
    %1184 = vmatpush.bf16.msra.mxu0 %v766
    %1185 = vmatpush.bf16.msra.mxu0 %v762
    %1186 = vmatmul.bf16.gmra.mxu0 %v1149
    %v1187 = vpop.f32.mrf.mxu0
    %v1188 = vadd.f32 0.0, %v1187
    %v1189 = vpop.f32.mrf.mxu0
    %v1190 = vadd.f32 0.0, %v1189
    %1191 = vdwg.mxu0
    %1192 = vmatpush.bf16.msra.mxu0 %v791
    %1193 = vmatpush.bf16.msra.mxu0 %v787
    %1194 = vmatpush.bf16.msra.mxu0 %v783
    %1195 = vmatpush.bf16.msra.mxu0 %v779
    %1196 = vmatpush.bf16.msra.mxu0 %v775
    %1197 = vmatpush.bf16.msra.mxu0 %v771
    %1198 = vmatpush.bf16.msra.mxu0 %v767
    %1199 = vmatpush.bf16.msra.mxu0 %v763
    %1200 = vmatmul.bf16.gmra.mxu0 %v1149
    %v1201 = vpop.f32.mrf.mxu0
    %v1202 = vadd.f32 0.0, %v1201
    %v1203 = vpop.f32.mrf.mxu0
    %v1204 = vadd.f32 0.0, %v1203
    %1205 = vdwg.mxu0
    %v1206 = vadd.f32 %v1141, %v1160
    %v1207 = vadd.f32 %v1142, %v1174
    %v1208 = vadd.f32 %v1143, %v1188
    %v1209 = vadd.f32 %v1144, %v1202
    %v1210 = vadd.f32 %v1145, %v1162
    %v1211 = vadd.f32 %v1146, %v1176
    %v1212 = vadd.f32 %v1147, %v1190
    %v1213 = vadd.f32 %v1148, %v1204
    %v1214 = vtanh.pop %v1206
    %v1215 = vtanh.pop %v1210
    %v1216 = vmul.f32 %v1214, 0.5
    %v1217 = vmul.f32 %v1215, 0.5
    %v1218 = vadd.f32 %v1216, 0.5
    %v1219 = vadd.f32 %v1217, 0.5
    %v1220 = vtanh.pop %v1207
    %v1221 = vtanh.pop %v1211
    %v1222 = vmul.f32 %v1220, 0.5
    %v1223 = vmul.f32 %v1221, 0.5
    %v1224 = vadd.f32 %v1222, 0.5
    %v1225 = vadd.f32 %v1223, 0.5
    %v1226 = vtanh.pop %v1208
    %v1227 = vtanh.pop %v1212
    %v1228 = vmul.f32 %v1226, 0.5
    %v1229 = vmul.f32 %v1227, 0.5
    %v1230 = vadd.f32 %v1228, 0.5
    %v1231 = vadd.f32 %v1229, 0.5
    %v1232 = vtanh.pop %v1209
    %v1233 = vtanh.pop %v1213
    %v1234 = vmul.f32 %v1218, %v1129
    %v1235 = vmul.f32 %v1219, %v1130
    %v1236 = vmul.f32 %v1224, %v1232
    %v1237 = vmul.f32 %v1225, %v1233
    %v1238 = vadd.f32 %v1234, %v1236
    %v1239 = vadd.f32 %v1235, %v1237
    %v1240 = vtanh.pop %v1238
    %v1241 = vtanh.pop %v1239
    %v1242 = vmul.f32 %v1230, %v1240
    %v1243 = vmul.f32 %v1231, %v1241
    %s1244 = scalar_lea.vmem [#allocation13], 48
    %1245 = vst [vmem:[%s1244] sm:$0xff] %v1242
    %1246 = vst [vmem:[%s1244 + $0x8] sm:$0xff] %v1243
    %s1247 = smul.u32 8, 4
    %s1248 = smul.addr %s1247, 8
    %s1249 = scalar_lea.vmem [#allocation4], %s1248
    %v1250 = vld [vmem:[%s1249] sm:$0xff]
    %v1251 = vld [vmem:[%s1249 + $0x8] sm:$0xff]
    %v1252 = vld [vmem:[%s1249 + $0x10] sm:$0xff]
    %v1253 = vld [vmem:[%s1249 + $0x18] sm:$0xff]
    %v1254 = vld [vmem:[%s1249 + $0x20] sm:$0xff]
    %v1255 = vld [vmem:[%s1249 + $0x28] sm:$0xff]
    %v1256 = vld [vmem:[%s1249 + $0x30] sm:$0xff]
    %v1257 = vld [vmem:[%s1249 + $0x38] sm:$0xff]
    %v1258 = vpack.c.bf16 %v1243, %v1242
    %1259 = vmatpush.bf16.msra.mxu0 %v788
    %1260 = vmatpush.bf16.msra.mxu0 %v784
    %1261 = vmatpush.bf16.msra.mxu0 %v780
    %1262 = vmatpush.bf16.msra.mxu0 %v776
    %1263 = vmatpush.bf16.msra.mxu0 %v772
    %1264 = vmatpush.bf16.msra.mxu0 %v768
    %1265 = vmatpush.bf16.msra.mxu0 %v764
    %1266 = vmatpush.bf16.msra.mxu0 %v760
    %1267 = vmatmul.bf16.gmra.mxu0 %v1258
    %v1268 = vpop.f32.mrf.mxu0
    %v1269 = vadd.f32 0.0, %v1268
    %v1270 = vpop.f32.mrf.mxu0
    %v1271 = vadd.f32 0.0, %v1270
    %1272 = vdwg.mxu0
    %1273 = vmatpush.bf16.msra.mxu0 %v789
    %1274 = vmatpush.bf16.msra.mxu0 %v785
    %1275 = vmatpush.bf16.msra.mxu0 %v781
    %1276 = vmatpush.bf16.msra.mxu0 %v777
    %1277 = vmatpush.bf16.msra.mxu0 %v773
    %1278 = vmatpush.bf16.msra.mxu0 %v769
    %1279 = vmatpush.bf16.msra.mxu0 %v765
    %1280 = vmatpush.bf16.msra.mxu0 %v761
    %1281 = vmatmul.bf16.gmra.mxu0 %v1258
    %v1282 = vpop.f32.mrf.mxu0
    %v1283 = vadd.f32 0.0, %v1282
    %v1284 = vpop.f32.mrf.mxu0
    %v1285 = vadd.f32 0.0, %v1284
    %1286 = vdwg.mxu0
    %1287 = vmatpush.bf16.msra.mxu0 %v790
    %1288 = vmatpush.bf16.msra.mxu0 %v786
    %1289 = vmatpush.bf16.msra.mxu0 %v782
    %1290 = vmatpush.bf16.msra.mxu0 %v778
    %1291 = vmatpush.bf16.msra.mxu0 %v774
    %1292 = vmatpush.bf16.msra.mxu0 %v770
    %1293 = vmatpush.bf16.msra.mxu0 %v766
    %1294 = vmatpush.bf16.msra.mxu0 %v762
    %1295 = vmatmul.bf16.gmra.mxu0 %v1258
    %v1296 = vpop.f32.mrf.mxu0
    %v1297 = vadd.f32 0.0, %v1296
    %v1298 = vpop.f32.mrf.mxu0
    %v1299 = vadd.f32 0.0, %v1298
    %1300 = vdwg.mxu0
    %1301 = vmatpush.bf16.msra.mxu0 %v791
    %1302 = vmatpush.bf16.msra.mxu0 %v787
    %1303 = vmatpush.bf16.msra.mxu0 %v783
    %1304 = vmatpush.bf16.msra.mxu0 %v779
    %1305 = vmatpush.bf16.msra.mxu0 %v775
    %1306 = vmatpush.bf16.msra.mxu0 %v771
    %1307 = vmatpush.bf16.msra.mxu0 %v767
    %1308 = vmatpush.bf16.msra.mxu0 %v763
    %1309 = vmatmul.bf16.gmra.mxu0 %v1258
    %v1310 = vpop.f32.mrf.mxu0
    %v1311 = vadd.f32 0.0, %v1310
    %v1312 = vpop.f32.mrf.mxu0
    %v1313 = vadd.f32 0.0, %v1312
    %1314 = vdwg.mxu0
    %v1315 = vadd.f32 %v1250, %v1269
    %v1316 = vadd.f32 %v1251, %v1283
    %v1317 = vadd.f32 %v1252, %v1297
    %v1318 = vadd.f32 %v1253, %v1311
    %v1319 = vadd.f32 %v1254, %v1271
    %v1320 = vadd.f32 %v1255, %v1285
    %v1321 = vadd.f32 %v1256, %v1299
    %v1322 = vadd.f32 %v1257, %v1313
    %v1323 = vtanh.pop %v1315
    %v1324 = vtanh.pop %v1319
    %v1325 = vmul.f32 %v1323, 0.5
    %v1326 = vmul.f32 %v1324, 0.5
    %v1327 = vadd.f32 %v1325, 0.5
    %v1328 = vadd.f32 %v1326, 0.5
    %v1329 = vtanh.pop %v1316
    %v1330 = vtanh.pop %v1320
    %v1331 = vmul.f32 %v1329, 0.5
    %v1332 = vmul.f32 %v1330, 0.5
    %v1333 = vadd.f32 %v1331, 0.5
    %v1334 = vadd.f32 %v1332, 0.5
    %v1335 = vtanh.pop %v1317
    %v1336 = vtanh.pop %v1321
    %v1337 = vmul.f32 %v1335, 0.5
    %v1338 = vmul.f32 %v1336, 0.5
    %v1339 = vadd.f32 %v1337, 0.5
    %v1340 = vadd.f32 %v1338, 0.5
    %v1341 = vtanh.pop %v1318
    %v1342 = vtanh.pop %v1322
    %v1343 = vmul.f32 %v1327, %v1238
    %v1344 = vmul.f32 %v1328, %v1239
    %v1345 = vmul.f32 %v1333, %v1341
    %v1346 = vmul.f32 %v1334, %v1342
    %v1347 = vadd.f32 %v1343, %v1345
    %v1348 = vadd.f32 %v1344, %v1346
    %v1349 = vtanh.pop %v1347
    %v1350 = vtanh.pop %v1348
    %v1351 = vmul.f32 %v1339, %v1349
    %v1352 = vmul.f32 %v1340, %v1350
    %s1353 = scalar_lea.vmem [#allocation13], 64
    %1354 = vst [vmem:[%s1353] sm:$0xff] %v1351
    %1355 = vst [vmem:[%s1353 + $0x8] sm:$0xff] %v1352
    %s1356 = smul.u32 10, 4
    %s1357 = smul.addr %s1356, 8
    %s1358 = scalar_lea.vmem [#allocation4], %s1357
    %v1359 = vld [vmem:[%s1358] sm:$0xff]
    %v1360 = vld [vmem:[%s1358 + $0x8] sm:$0xff]
    %v1361 = vld [vmem:[%s1358 + $0x10] sm:$0xff]
    %v1362 = vld [vmem:[%s1358 + $0x18] sm:$0xff]
    %v1363 = vld [vmem:[%s1358 + $0x20] sm:$0xff]
    %v1364 = vld [vmem:[%s1358 + $0x28] sm:$0xff]
    %v1365 = vld [vmem:[%s1358 + $0x30] sm:$0xff]
    %v1366 = vld [vmem:[%s1358 + $0x38] sm:$0xff]
    %v1367 = vpack.c.bf16 %v1352, %v1351
    %1368 = vmatpush.bf16.msra.mxu0 %v788
    %1369 = vmatpush.bf16.msra.mxu0 %v784
    %1370 = vmatpush.bf16.msra.mxu0 %v780
    %1371 = vmatpush.bf16.msra.mxu0 %v776
    %1372 = vmatpush.bf16.msra.mxu0 %v772
    %1373 = vmatpush.bf16.msra.mxu0 %v768
    %1374 = vmatpush.bf16.msra.mxu0 %v764
    %1375 = vmatpush.bf16.msra.mxu0 %v760
    %1376 = vmatmul.bf16.gmra.mxu0 %v1367
    %v1377 = vpop.f32.mrf.mxu0
    %v1378 = vadd.f32 0.0, %v1377
    %v1379 = vpop.f32.mrf.mxu0
    %v1380 = vadd.f32 0.0, %v1379
    %1381 = vdwg.mxu0
    %1382 = vmatpush.bf16.msra.mxu0 %v789
    %1383 = vmatpush.bf16.msra.mxu0 %v785
    %1384 = vmatpush.bf16.msra.mxu0 %v781
    %1385 = vmatpush.bf16.msra.mxu0 %v777
    %1386 = vmatpush.bf16.msra.mxu0 %v773
    %1387 = vmatpush.bf16.msra.mxu0 %v769
    %1388 = vmatpush.bf16.msra.mxu0 %v765
    %1389 = vmatpush.bf16.msra.mxu0 %v761
    %1390 = vmatmul.bf16.gmra.mxu0 %v1367
    %v1391 = vpop.f32.mrf.mxu0
    %v1392 = vadd.f32 0.0, %v1391
    %v1393 = vpop.f32.mrf.mxu0
    %v1394 = vadd.f32 0.0, %v1393
    %1395 = vdwg.mxu0
    %1396 = vmatpush.bf16.msra.mxu0 %v790
    %1397 = vmatpush.bf16.msra.mxu0 %v786
    %1398 = vmatpush.bf16.msra.mxu0 %v782
    %1399 = vmatpush.bf16.msra.mxu0 %v778
    %1400 = vmatpush.bf16.msra.mxu0 %v774
    %1401 = vmatpush.bf16.msra.mxu0 %v770
    %1402 = vmatpush.bf16.msra.mxu0 %v766
    %1403 = vmatpush.bf16.msra.mxu0 %v762
    %1404 = vmatmul.bf16.gmra.mxu0 %v1367
    %v1405 = vpop.f32.mrf.mxu0
    %v1406 = vadd.f32 0.0, %v1405
    %v1407 = vpop.f32.mrf.mxu0
    %v1408 = vadd.f32 0.0, %v1407
    %1409 = vdwg.mxu0
    %1410 = vmatpush.bf16.msra.mxu0 %v791
    %1411 = vmatpush.bf16.msra.mxu0 %v787
    %1412 = vmatpush.bf16.msra.mxu0 %v783
    %1413 = vmatpush.bf16.msra.mxu0 %v779
    %1414 = vmatpush.bf16.msra.mxu0 %v775
    %1415 = vmatpush.bf16.msra.mxu0 %v771
    %1416 = vmatpush.bf16.msra.mxu0 %v767
    %1417 = vmatpush.bf16.msra.mxu0 %v763
    %1418 = vmatmul.bf16.gmra.mxu0 %v1367
    %v1419 = vpop.f32.mrf.mxu0
    %v1420 = vadd.f32 0.0, %v1419
    %v1421 = vpop.f32.mrf.mxu0
    %v1422 = vadd.f32 0.0, %v1421
    %1423 = vdwg.mxu0
    %v1424 = vadd.f32 %v1359, %v1378
    %v1425 = vadd.f32 %v1360, %v1392
    %v1426 = vadd.f32 %v1361, %v1406
    %v1427 = vadd.f32 %v1362, %v1420
    %v1428 = vadd.f32 %v1363, %v1380
    %v1429 = vadd.f32 %v1364, %v1394
    %v1430 = vadd.f32 %v1365, %v1408
    %v1431 = vadd.f32 %v1366, %v1422
    %v1432 = vtanh.pop %v1424
    %v1433 = vtanh.pop %v1428
    %v1434 = vmul.f32 %v1432, 0.5
    %v1435 = vmul.f32 %v1433, 0.5
    %v1436 = vadd.f32 %v1434, 0.5
    %v1437 = vadd.f32 %v1435, 0.5
    %v1438 = vtanh.pop %v1425
    %v1439 = vtanh.pop %v1429
    %v1440 = vmul.f32 %v1438, 0.5
    %v1441 = vmul.f32 %v1439, 0.5
    %v1442 = vadd.f32 %v1440, 0.5
    %v1443 = vadd.f32 %v1441, 0.5
    %v1444 = vtanh.pop %v1426
    %v1445 = vtanh.pop %v1430
    %v1446 = vmul.f32 %v1444, 0.5
    %v1447 = vmul.f32 %v1445, 0.5
    %v1448 = vadd.f32 %v1446, 0.5
    %v1449 = vadd.f32 %v1447, 0.5
    %v1450 = vtanh.pop %v1427
    %v1451 = vtanh.pop %v1431
    %v1452 = vmul.f32 %v1436, %v1347
    %v1453 = vmul.f32 %v1437, %v1348
    %v1454 = vmul.f32 %v1442, %v1450
    %v1455 = vmul.f32 %v1443, %v1451
    %v1456 = vadd.f32 %v1452, %v1454
    %v1457 = vadd.f32 %v1453, %v1455
    %v1458 = vtanh.pop %v1456
    %v1459 = vtanh.pop %v1457
    %v1460 = vmul.f32 %v1448, %v1458
    %v1461 = vmul.f32 %v1449, %v1459
    %s1462 = scalar_lea.vmem [#allocation13], 80
    %1463 = vst [vmem:[%s1462] sm:$0xff] %v1460
    %1464 = vst [vmem:[%s1462 + $0x8] sm:$0xff] %v1461
    %s1465 = smul.u32 12, 4
    %s1466 = smul.addr %s1465, 8
    %s1467 = scalar_lea.vmem [#allocation4], %s1466
    %v1468 = vld [vmem:[%s1467] sm:$0xff]
    %v1469 = vld [vmem:[%s1467 + $0x8] sm:$0xff]
    %v1470 = vld [vmem:[%s1467 + $0x10] sm:$0xff]
    %v1471 = vld [vmem:[%s1467 + $0x18] sm:$0xff]
    %v1472 = vld [vmem:[%s1467 + $0x20] sm:$0xff]
    %v1473 = vld [vmem:[%s1467 + $0x28] sm:$0xff]
    %v1474 = vld [vmem:[%s1467 + $0x30] sm:$0xff]
    %v1475 = vld [vmem:[%s1467 + $0x38] sm:$0xff]
    %v1476 = vpack.c.bf16 %v1461, %v1460
    %1477 = vmatpush.bf16.msra.mxu0 %v788
    %1478 = vmatpush.bf16.msra.mxu0 %v784
    %1479 = vmatpush.bf16.msra.mxu0 %v780
    %1480 = vmatpush.bf16.msra.mxu0 %v776
    %1481 = vmatpush.bf16.msra.mxu0 %v772
    %1482 = vmatpush.bf16.msra.mxu0 %v768
    %1483 = vmatpush.bf16.msra.mxu0 %v764
    %1484 = vmatpush.bf16.msra.mxu0 %v760
    %1485 = vmatmul.bf16.gmra.mxu0 %v1476
    %v1486 = vpop.f32.mrf.mxu0
    %v1487 = vadd.f32 0.0, %v1486
    %v1488 = vpop.f32.mrf.mxu0
    %v1489 = vadd.f32 0.0, %v1488
    %1490 = vdwg.mxu0
    %1491 = vmatpush.bf16.msra.mxu0 %v789
    %1492 = vmatpush.bf16.msra.mxu0 %v785
    %1493 = vmatpush.bf16.msra.mxu0 %v781
    %1494 = vmatpush.bf16.msra.mxu0 %v777
    %1495 = vmatpush.bf16.msra.mxu0 %v773
    %1496 = vmatpush.bf16.msra.mxu0 %v769
    %1497 = vmatpush.bf16.msra.mxu0 %v765
    %1498 = vmatpush.bf16.msra.mxu0 %v761
    %1499 = vmatmul.bf16.gmra.mxu0 %v1476
    %v1500 = vpop.f32.mrf.mxu0
    %v1501 = vadd.f32 0.0, %v1500
    %v1502 = vpop.f32.mrf.mxu0
    %v1503 = vadd.f32 0.0, %v1502
    %1504 = vdwg.mxu0
    %1505 = vmatpush.bf16.msra.mxu0 %v790
    %1506 = vmatpush.bf16.msra.mxu0 %v786
    %1507 = vmatpush.bf16.msra.mxu0 %v782
    %1508 = vmatpush.bf16.msra.mxu0 %v778
    %1509 = vmatpush.bf16.msra.mxu0 %v774
    %1510 = vmatpush.bf16.msra.mxu0 %v770
    %1511 = vmatpush.bf16.msra.mxu0 %v766
    %1512 = vmatpush.bf16.msra.mxu0 %v762
    %1513 = vmatmul.bf16.gmra.mxu0 %v1476
    %v1514 = vpop.f32.mrf.mxu0
    %v1515 = vadd.f32 0.0, %v1514
    %v1516 = vpop.f32.mrf.mxu0
    %v1517 = vadd.f32 0.0, %v1516
    %1518 = vdwg.mxu0
    %1519 = vmatpush.bf16.msra.mxu0 %v791
    %1520 = vmatpush.bf16.msra.mxu0 %v787
    %1521 = vmatpush.bf16.msra.mxu0 %v783
    %1522 = vmatpush.bf16.msra.mxu0 %v779
    %1523 = vmatpush.bf16.msra.mxu0 %v775
    %1524 = vmatpush.bf16.msra.mxu0 %v771
    %1525 = vmatpush.bf16.msra.mxu0 %v767
    %1526 = vmatpush.bf16.msra.mxu0 %v763
    %1527 = vmatmul.bf16.gmra.mxu0 %v1476
    %v1528 = vpop.f32.mrf.mxu0
    %v1529 = vadd.f32 0.0, %v1528
    %v1530 = vpop.f32.mrf.mxu0
    %v1531 = vadd.f32 0.0, %v1530
    %1532 = vdwg.mxu0
    %v1533 = vadd.f32 %v1468, %v1487
    %v1534 = vadd.f32 %v1469, %v1501
    %v1535 = vadd.f32 %v1470, %v1515
    %v1536 = vadd.f32 %v1471, %v1529
    %v1537 = vadd.f32 %v1472, %v1489
    %v1538 = vadd.f32 %v1473, %v1503
    %v1539 = vadd.f32 %v1474, %v1517
    %v1540 = vadd.f32 %v1475, %v1531
    %v1541 = vtanh.pop %v1533
    %v1542 = vtanh.pop %v1537
    %v1543 = vmul.f32 %v1541, 0.5
    %v1544 = vmul.f32 %v1542, 0.5
    %v1545 = vadd.f32 %v1543, 0.5
    %v1546 = vadd.f32 %v1544, 0.5
    %v1547 = vtanh.pop %v1534
    %v1548 = vtanh.pop %v1538
    %v1549 = vmul.f32 %v1547, 0.5
    %v1550 = vmul.f32 %v1548, 0.5
    %v1551 = vadd.f32 %v1549, 0.5
    %v1552 = vadd.f32 %v1550, 0.5
    %v1553 = vtanh.pop %v1535
    %v1554 = vtanh.pop %v1539
    %v1555 = vmul.f32 %v1553, 0.5
    %v1556 = vmul.f32 %v1554, 0.5
    %v1557 = vadd.f32 %v1555, 0.5
    %v1558 = vadd.f32 %v1556, 0.5
    %v1559 = vtanh.pop %v1536
    %v1560 = vtanh.pop %v1540
    %v1561 = vmul.f32 %v1545, %v1456
    %v1562 = vmul.f32 %v1546, %v1457
    %v1563 = vmul.f32 %v1551, %v1559
    %v1564 = vmul.f32 %v1552, %v1560
    %v1565 = vadd.f32 %v1561, %v1563
    %v1566 = vadd.f32 %v1562, %v1564
    %v1567 = vtanh.pop %v1565
    %v1568 = vtanh.pop %v1566
    %v1569 = vmul.f32 %v1557, %v1567
    %v1570 = vmul.f32 %v1558, %v1568
    %s1571 = scalar_lea.vmem [#allocation13], 96
    %1572 = vst [vmem:[%s1571] sm:$0xff] %v1569
    %1573 = vst [vmem:[%s1571 + $0x8] sm:$0xff] %v1570
    %s1574 = smul.u32 14, 4
    %s1575 = smul.addr %s1574, 8
    %s1576 = scalar_lea.vmem [#allocation4], %s1575
    %v1577 = vld [vmem:[%s1576] sm:$0xff]
    %v1578 = vld [vmem:[%s1576 + $0x8] sm:$0xff]
    %v1579 = vld [vmem:[%s1576 + $0x10] sm:$0xff]
    %v1580 = vld [vmem:[%s1576 + $0x18] sm:$0xff]
    %v1581 = vld [vmem:[%s1576 + $0x20] sm:$0xff]
    %v1582 = vld [vmem:[%s1576 + $0x28] sm:$0xff]
    %v1583 = vld [vmem:[%s1576 + $0x30] sm:$0xff]
    %v1584 = vld [vmem:[%s1576 + $0x38] sm:$0xff]
    %v1585 = vpack.c.bf16 %v1570, %v1569
    %1586 = vmatpush.bf16.msra.mxu0 %v788
    %1587 = vmatpush.bf16.msra.mxu0 %v784
    %1588 = vmatpush.bf16.msra.mxu0 %v780
    %1589 = vmatpush.bf16.msra.mxu0 %v776
    %1590 = vmatpush.bf16.msra.mxu0 %v772
    %1591 = vmatpush.bf16.msra.mxu0 %v768
    %1592 = vmatpush.bf16.msra.mxu0 %v764
    %1593 = vmatpush.bf16.msra.mxu0 %v760
    %1594 = vmatmul.bf16.gmra.mxu0 %v1585
    %v1595 = vpop.f32.mrf.mxu0
    %v1596 = vadd.f32 0.0, %v1595
    %v1597 = vpop.f32.mrf.mxu0
    %v1598 = vadd.f32 0.0, %v1597
    %1599 = vdwg.mxu0
    %1600 = vmatpush.bf16.msra.mxu0 %v789
    %1601 = vmatpush.bf16.msra.mxu0 %v785
    %1602 = vmatpush.bf16.msra.mxu0 %v781
    %1603 = vmatpush.bf16.msra.mxu0 %v777
    %1604 = vmatpush.bf16.msra.mxu0 %v773
    %1605 = vmatpush.bf16.msra.mxu0 %v769
    %1606 = vmatpush.bf16.msra.mxu0 %v765
    %1607 = vmatpush.bf16.msra.mxu0 %v761
    %1608 = vmatmul.bf16.gmra.mxu0 %v1585
    %v1609 = vpop.f32.mrf.mxu0
    %v1610 = vadd.f32 0.0, %v1609
    %v1611 = vpop.f32.mrf.mxu0
    %v1612 = vadd.f32 0.0, %v1611
    %1613 = vdwg.mxu0
    %1614 = vmatpush.bf16.msra.mxu0 %v790
    %1615 = vmatpush.bf16.msra.mxu0 %v786
    %1616 = vmatpush.bf16.msra.mxu0 %v782
    %1617 = vmatpush.bf16.msra.mxu0 %v778
    %1618 = vmatpush.bf16.msra.mxu0 %v774
    %1619 = vmatpush.bf16.msra.mxu0 %v770
    %1620 = vmatpush.bf16.msra.mxu0 %v766
    %1621 = vmatpush.bf16.msra.mxu0 %v762
    %1622 = vmatmul.bf16.gmra.mxu0 %v1585
    %v1623 = vpop.f32.mrf.mxu0
    %v1624 = vadd.f32 0.0, %v1623
    %v1625 = vpop.f32.mrf.mxu0
    %v1626 = vadd.f32 0.0, %v1625
    %1627 = vdwg.mxu0
    %1628 = vmatpush.bf16.msra.mxu0 %v791
    %1629 = vmatpush.bf16.msra.mxu0 %v787
    %1630 = vmatpush.bf16.msra.mxu0 %v783
    %1631 = vmatpush.bf16.msra.mxu0 %v779
    %1632 = vmatpush.bf16.msra.mxu0 %v775
    %1633 = vmatpush.bf16.msra.mxu0 %v771
    %1634 = vmatpush.bf16.msra.mxu0 %v767
    %1635 = vmatpush.bf16.msra.mxu0 %v763
    %1636 = vmatmul.bf16.gmra.mxu0 %v1585
    %v1637 = vpop.f32.mrf.mxu0
    %v1638 = vadd.f32 0.0, %v1637
    %v1639 = vpop.f32.mrf.mxu0
    %v1640 = vadd.f32 0.0, %v1639
    %1641 = vdwg.mxu0
    %v1642 = vadd.f32 %v1577, %v1596
    %v1643 = vadd.f32 %v1578, %v1610
    %v1644 = vadd.f32 %v1579, %v1624
    %v1645 = vadd.f32 %v1580, %v1638
    %v1646 = vadd.f32 %v1581, %v1598
    %v1647 = vadd.f32 %v1582, %v1612
    %v1648 = vadd.f32 %v1583, %v1626
    %v1649 = vadd.f32 %v1584, %v1640
    %v1650 = vtanh.pop %v1642
    %v1651 = vtanh.pop %v1646
    %v1652 = vmul.f32 %v1650, 0.5
    %v1653 = vmul.f32 %v1651, 0.5
    %v1654 = vadd.f32 %v1652, 0.5
    %v1655 = vadd.f32 %v1653, 0.5
    %v1656 = vtanh.pop %v1643
    %v1657 = vtanh.pop %v1647
    %v1658 = vmul.f32 %v1656, 0.5
    %v1659 = vmul.f32 %v1657, 0.5
    %v1660 = vadd.f32 %v1658, 0.5
    %v1661 = vadd.f32 %v1659, 0.5
    %v1662 = vtanh.pop %v1644
    %v1663 = vtanh.pop %v1648
    %v1664 = vmul.f32 %v1662, 0.5
    %v1665 = vmul.f32 %v1663, 0.5
    %v1666 = vadd.f32 %v1664, 0.5
    %v1667 = vadd.f32 %v1665, 0.5
    %v1668 = vtanh.pop %v1645
    %v1669 = vtanh.pop %v1649
    %v1670 = vmul.f32 %v1654, %v1565
    %v1671 = vmul.f32 %v1655, %v1566
    %v1672 = vmul.f32 %v1660, %v1668
    %v1673 = vmul.f32 %v1661, %v1669
    %v1674 = vadd.f32 %v1670, %v1672
    %v1675 = vadd.f32 %v1671, %v1673
    %v1676 = vtanh.pop %v1674
    %v1677 = vtanh.pop %v1675
    %v1678 = vmul.f32 %v1666, %v1676
    %v1679 = vmul.f32 %v1667, %v1677
    %s1680 = scalar_lea.vmem [#allocation13], 112
    %1681 = vst [vmem:[%s1680] sm:$0xff] %v1678
    %1682 = vst [vmem:[%s1680 + $0x8] sm:$0xff] %v1679
    %1683 = vst [vmem:[#allocation2] sm:$0xff] %v1678
    %1684 = vst [vmem:[#allocation2 + $0x8] sm:$0xff] %v1679
    %1685 = vst [vmem:[#allocation3] sm:$0xff] %v1674
    %1686 = vst [vmem:[#allocation3 + $0x8] sm:$0xff] %v1675
    // Predicated region
    $region38: #{tpu_custom_call.1} parent=1 // pred_check
      %p1687 = pneg %p82
    $region39: #{tpu_custom_call.1} parent=1 // pred_check_branch
      %1689 = sbr.rel (%p1687) target = $region41
    $region40: #{tpu_custom_call.1} parent=1 // pred_region
      %1690 = vst [vmem:[#allocation14] sm:$0xff] %v1674
      %1691 = vst [vmem:[#allocation14 + $0x8] sm:$0xff] %v1675
    $region41: #{tpu_custom_call.1} parent=1 // pred_fallthru
      _
    // Predicated region
    $region42: #{tpu_custom_call.1} parent=1 // pred_check
      _
    $region43: #{tpu_custom_call.1} parent=1 // pred_check_branch
      %1693 = sbr.rel (0) target = $region45
    $region44: #{tpu_custom_call.1} parent=1 // pred_region
      %1695 = vsyncadd [#allocation7], 0
      %s1696 = sshll.u32 [#allocation13], 4
      %s1697 = int_to_ptr.vmem [resolvable:$true] %s1696
      %s1698 = sshll.u32 %s4, 4
      %s1699 = int_to_ptr.hbm [resolvable:$true] %s1698
      %1704 = dma.vmem_to_hbm [thread:$0]  %s1697, 2048, %s1699, [#allocation7], 128, 128, 8
    $region45: #{tpu_custom_call.1} parent=1 // pred_fallthru
      _
    // Predicated region
    $region46: #{tpu_custom_call.1} parent=1 // pred_check
      _
    $region47: #{tpu_custom_call.1} parent=1 // pred_check_branch
      %1706 = sbr.rel (0) target = $region49
    $region48: #{tpu_custom_call.1} parent=1 // pred_region
      %1708 = vsyncadd [#allocation15], 0
      %s1709 = sshll.u32 [#allocation14], 4
      %s1710 = int_to_ptr.vmem [resolvable:$true] %s1709
      %s1711 = sshll.u32 %s5, 4
      %s1712 = int_to_ptr.hbm [resolvable:$true] %s1711
      %1717 = dma.vmem_to_hbm [thread:$0]  %s1710, 256, %s1712, [#allocation15], 128, 128, 8
    $region49: #{tpu_custom_call.1} parent=1 // pred_fallthru
      _
    // Predicated region
    $region50: #{tpu_custom_call.1} parent=1 // pred_check
      _
    $region51: #{tpu_custom_call.1} parent=1 // pred_check_branch
      %1719 = sbr.rel (0) target = $region53
    $region52: #{tpu_custom_call.1} parent=1 // pred_region
      %1721 = dma.done [#allocation7], 2048
    $region53: #{tpu_custom_call.1} parent=1 // pred_fallthru
      _
    // Predicated region
    $region54: #{tpu_custom_call.1} parent=1 // pred_check
      _
    $region55: #{tpu_custom_call.1} parent=1 // pred_check_branch
      %1723 = sbr.rel (0) target = $region57
    $region56: #{tpu_custom_call.1} parent=1 // pred_region
      %1725 = dma.done [#allocation15], 256
    $region57: #{tpu_custom_call.1} parent=1 // pred_fallthru
      _
    %1726 = vsyncpa [#allocation6], 1
    %1727 = vsyncpa [#allocation9], 1
    %1728 = vsyncpa [#allocation12], 1
    %1729 = vsyncpa [#allocation7], 1
    %1730 = vsyncpa [#allocation15], 1

</llo_original>
